<compile_context>
chip_gen: v7x
topology: tpu7x:2x2x1
jax: 0.10.0
libtpu: 0.0.40
codegen_flags: <defaults>
</compile_context>

<pallas_src>
import jax
import jax.numpy as jnp
from jax.experimental import pallas as pl
from jax.experimental.pallas import tpu as pltpu

EPS = 1e-5  # nn.LayerNorm default


def _layernorm(x, gamma, beta):
    mu = jnp.mean(x, axis=-1, keepdims=True)
    var = jnp.mean((x - mu) ** 2, axis=-1, keepdims=True)
    return (x - mu) * jax.lax.rsqrt(var + EPS) * gamma + beta


def _softmax_last(s):
    # lane-axis softmax; divide goes to the EUP via approx reciprocal.
    m = jnp.max(s, axis=-1, keepdims=True)
    p = jnp.exp(s - m)
    return p * pl.reciprocal(jnp.sum(p, axis=-1, keepdims=True), approx=True)


# ----------------------------- fused layer kernel -----------------------------
def _make_fused_kernel(B, Lt, Lv, d_k):
    def kernel(t_ref, v_ref,
               wt_ref, bt_ref, wv_ref, bv_ref,
               g1t_ref, be1t_ref, w1t_ref, b1t_ref, w2t_ref, b2t_ref, g2t_ref, be2t_ref,
               g1v_ref, be1v_ref, w1v_ref, b1v_ref, w2v_ref, b2v_ref, g2v_ref, be2v_ref,
               yt_ref, yv_ref, attn_ref):
        t = t_ref[...]                                   # (B*Lt, d_t) f32, lane-dense
        v = v_ref[...]                                   # (B*Lv, d_v) f32

        # Fused projections: [q | vv] from t, [k | vt] from v (2 matmuls, not 4).
        # bf16 MXU operands, f32 accumulation; M dimension is B*L.
        proj_t = jnp.dot(t.astype(jnp.bfloat16), wt_ref[...],
                         preferred_element_type=jnp.float32) + bt_ref[...]
        proj_v = jnp.dot(v.astype(jnp.bfloat16), wv_ref[...],
                         preferred_element_type=jnp.float32) + bv_ref[...]
        q = proj_t[:, :d_k].reshape(B, Lt, d_k).astype(jnp.bfloat16)
        vv = proj_t[:, d_k:].reshape(B, Lt, -1).astype(jnp.bfloat16)
        k = proj_v[:, :d_k].reshape(B, Lv, d_k).astype(jnp.bfloat16)
        vt = proj_v[:, d_k:].reshape(B, Lv, -1).astype(jnp.bfloat16)

        scale = d_k ** -0.5
        # Both attention directions via lane-axis softmax (scores and scores^T
        # from two small bf16 MXU matmuls; no cross-sublane softmax, no XLU
        # transpose).  For v5e with d_k >= 64 the transpose form would be
        # preferable; at d_k = 16 the duplicate matmul is the right trade.
        scores = jnp.einsum('bqd,bkd->bqk', q, k,
                            preferred_element_type=jnp.float32) * scale
        scores_t = jnp.einsum('bkd,bqd->bkq', k, q,
                              preferred_element_type=jnp.float32) * scale
        a_t = _softmax_last(scores)                       # softmax over Lv
        a_vt = _softmax_last(scores_t)                    # == softmax(scores, axis=1).T
        new_t = jnp.einsum('bqk,bkd->bqd', a_t.astype(jnp.bfloat16), vt,
                           preferred_element_type=jnp.float32)   # (B, Lt, d_t)
        new_v = jnp.einsum('bkq,bqd->bkd', a_vt.astype(jnp.bfloat16), vv,
                           preferred_element_type=jnp.float32)   # (B, Lv, d_v)
        attn_ref[...] = a_t                               # kept f32 (module returns attn)

        # residual + norm1 + conv1(k=1)+relu + conv2(k=1) + residual + norm2
        # (rows are B*L, so each FFN matmul is a single MXU pass over the batch)
        def ffn(x, g1, be1, w1, b1, w2, b2, g2, be2):
            y = _layernorm(x, g1, be1)
            h = jnp.dot(y.astype(jnp.bfloat16), w1,
                        preferred_element_type=jnp.float32) + b1
            h = jnp.maximum(h, 0.0)                       # relu
            y2 = jnp.dot(h.astype(jnp.bfloat16), w2,
                         preferred_element_type=jnp.float32) + b2
            return _layernorm(x + y2, g2, be2)

        xt = t + new_t.reshape(B * Lt, -1)
        xv = v + new_v.reshape(B * Lv, -1)
        yt_ref[...] = ffn(xt, g1t_ref[...], be1t_ref[...], w1t_ref[...], b1t_ref[...],
                          w2t_ref[...], b2t_ref[...], g2t_ref[...], be2t_ref[...])
        yv_ref[...] = ffn(xv, g1v_ref[...], be1v_ref[...], w1v_ref[...], b1v_ref[...],
                          w2v_ref[...], b2v_ref[...], g2v_ref[...], be2v_ref[...])
    return kernel


# --------------------------- one-time parameter prep ---------------------------
def prepare_params(params):
    """Hoisted out of the per-call jit path: concat + bf16-cast weights once."""
    pa, pt, pv = params['attn'], params['t'], params['v']
    bf16 = lambda w: w.astype(jnp.bfloat16)
    weights = (
        bf16(jnp.concatenate([pa['wq'], pa['wvv']], axis=1)),   # (d_t, d_k+d_v)
        jnp.concatenate([pa['bq'], pa['bvv']], axis=1),         # (1, d_k+d_v)
        bf16(jnp.concatenate([pa['wk'], pa['wvt']], axis=1)),   # (d_v, d_k+d_t)
        jnp.concatenate([pa['bk'], pa['bvt']], axis=1),         # (1, d_k+d_t)
        pt['g1'], pt['be1'], bf16(pt['w1']), pt['b1'], bf16(pt['w2']), pt['b2'],
        pt['g2'], pt['be2'],
        pv['g1'], pv['be1'], bf16(pv['w1']), pv['b1'], bf16(pv['w2']), pv['b2'],
        pv['g2'], pv['be2'],
    )
    return weights


# --------------------------------- wrapper ------------------------------------
@jax.jit
def tv_encoder_layer(t_in, v_in, weights):
    B, d_t, Lt = t_in.shape
    _, d_v, Lv = v_in.shape
    d_k = weights[0].shape[1] - d_v

    # NCW -> NLC in XLA (mirrors the module's own permute), batch folded into rows.
    t_flat = jnp.transpose(t_in, (0, 2, 1)).reshape(B * Lt, d_t)
    v_flat = jnp.transpose(v_in, (0, 2, 1)).reshape(B * Lv, d_v)

    vmem = pl.BlockSpec(memory_space=pltpu.MemorySpace.VMEM)
    yt_flat, yv_flat, attn = pl.pallas_call(
        _make_fused_kernel(B, Lt, Lv, d_k),
        out_shape=(jax.ShapeDtypeStruct((B * Lt, d_t), jnp.float32),
                   jax.ShapeDtypeStruct((B * Lv, d_v), jnp.float32),
                   jax.ShapeDtypeStruct((B, Lt, Lv), jnp.float32)),
        in_specs=[vmem] * (2 + len(weights)),
        out_specs=(vmem, vmem, vmem),
    )(t_flat, v_flat, *weights)

    # NLC -> NCW back in the consumer (keeps kernel stores lane-dense in d).
    yt = jnp.transpose(yt_flat.reshape(B, Lt, d_t), (0, 2, 1))
    yv = jnp.transpose(yv_flat.reshape(B, Lv, d_v), (0, 2, 1))
    return yt, yv, attn


# ---------------------------- parameter init -----------------------------------
def init_params(key, d_t, d_v, d_k):
    keys = jax.random.split(key, 10)
    rn = lambda k, shape: jax.random.normal(k, shape, jnp.float32) * 0.1
    attn = dict(
        wq=rn(keys[0], (d_t, d_k)), bq=rn(keys[1], (1, d_k)),
        wk=rn(keys[2], (d_v, d_k)), bk=rn(keys[3], (1, d_k)),
        wvt=rn(keys[4], (d_v, d_t)), bvt=rn(keys[5], (1, d_t)),
        wvv=rn(keys[6], (d_t, d_v)), bvv=rn(keys[7], (1, d_v)),
    )
    def ffn_params(k, d):
        k1, k2, k3, k4 = jax.random.split(k, 4)
        d_ff = 4 * d
        return dict(
            g1=jnp.ones((1, d), jnp.float32), be1=jnp.zeros((1, d), jnp.float32),
            w1=rn(k1, (d, d_ff)), b1=rn(k2, (1, d_ff)),
            w2=rn(k3, (d_ff, d)), b2=rn(k4, (1, d)),
            g2=jnp.ones((1, d), jnp.float32), be2=jnp.zeros((1, d), jnp.float32),
        )
    return dict(attn=attn, t=ffn_params(keys[8], d_t), v=ffn_params(keys[9], d_v))


# ------------------------------ pure-JAX ref ------------------------------------
# Mirrors the kernel's dtype policy (bf16 MXU operands, f32 accumulation/elementwise).
def reference_forward(t_in, v_in, params):
    pa, pt, pv = params['attn'], params['t'], params['v']
    bf16 = lambda x: x.astype(jnp.bfloat16)
    t = jnp.transpose(t_in, (0, 2, 1))
    v = jnp.transpose(v_in, (0, 2, 1))

    def proj(x, w, b):
        return jnp.einsum('bld,de->ble', bf16(x), bf16(w),
                          preferred_element_type=jnp.float32) + b

    q = proj(t, pa['wq'], pa['bq'])
    k = proj(v, pa['wk'], pa['bk'])
    vt = proj(v, pa['wvt'], pa['bvt'])
    vv = proj(t, pa['wvv'], pa['bvv'])
    scale = q.shape[-1] ** -0.5
    scores = jnp.einsum('bqe,bke->bqk', bf16(q), bf16(k),
                        preferred_element_type=jnp.float32) * scale
    a_t = jax.nn.softmax(scores, axis=-1)
    a_v = jax.nn.softmax(scores, axis=1)
    new_t = jnp.einsum('bqk,bkd->bqd', bf16(a_t), bf16(vt),
                       preferred_element_type=jnp.float32)
    new_v = jnp.einsum('bqk,bqd->bkd', bf16(a_v), bf16(vv),
                       preferred_element_type=jnp.float32)

    def ffn(x, p):
        y = _layernorm(x, p['g1'], p['be1'])
        h = jax.nn.relu(jnp.einsum('bld,df->blf', bf16(y), bf16(p['w1']),
                                   preferred_element_type=jnp.float32) + p['b1'])
        y2 = jnp.einsum('blf,fd->bld', bf16(h), bf16(p['w2']),
                        preferred_element_type=jnp.float32) + p['b2']
        return _layernorm(x + y2, p['g2'], p['be2'])

    yt = ffn(t + new_t, pt)
    yv = ffn(v + new_v, pv)
    return jnp.transpose(yt, (0, 2, 1)), jnp.transpose(yv, (0, 2, 1)), a_t


if __name__ == "__main__":
    B, Lt, Lv, d_t, d_v, d_k = 2, 8, 8, 32, 16, 16
    key = jax.random.PRNGKey(0)
    kt, kv, kp = jax.random.split(key, 3)
    # PyTorch forward expects (B, d, L) inputs (it permutes to (B, L, d) itself).
    t_in = jax.random.normal(kt, (B, d_t, Lt), jnp.float32)
    v_in = jax.random.normal(kv, (B, d_v, Lv), jnp.float32)
    params = init_params(kp, d_t, d_v, d_k)
    weights = prepare_params(params)        # one-time: concat + bf16 cast

    yt, yv, attn = jax.block_until_ready(tv_encoder_layer(t_in, v_in, weights))
    yt_r, yv_r, attn_r = reference_forward(t_in, v_in, params)

    assert yt.shape == (B, d_t, Lt) and yv.shape == (B, d_v, Lv) and attn.shape == (B, Lt, Lv)
    assert jnp.allclose(yt, yt_r, atol=2e-2, rtol=2e-2)
    assert jnp.allclose(yv, yv_r, atol=2e-2, rtol=2e-2)
    assert jnp.allclose(attn, attn_r, atol=2e-2, rtol=2e-2)
    print("KERNEL_OK")
</pallas_src>

<mosaic_0001>
module attributes {stable_mosaic.version = 11 : i64} {
  func.func @kernel(%arg0: memref<16x32xf32, #tpu.memory_space<vmem>>, %arg1: memref<16x16xf32, #tpu.memory_space<vmem>>, %arg2: memref<32x32xbf16, #tpu.memory_space<vmem>>, %arg3: memref<1x32xf32, #tpu.memory_space<vmem>>, %arg4: memref<16x48xbf16, #tpu.memory_space<vmem>>, %arg5: memref<1x48xf32, #tpu.memory_space<vmem>>, %arg6: memref<1x32xf32, #tpu.memory_space<vmem>>, %arg7: memref<1x32xf32, #tpu.memory_space<vmem>>, %arg8: memref<32x128xbf16, #tpu.memory_space<vmem>>, %arg9: memref<1x128xf32, #tpu.memory_space<vmem>>, %arg10: memref<128x32xbf16, #tpu.memory_space<vmem>>, %arg11: memref<1x32xf32, #tpu.memory_space<vmem>>, %arg12: memref<1x32xf32, #tpu.memory_space<vmem>>, %arg13: memref<1x32xf32, #tpu.memory_space<vmem>>, %arg14: memref<1x16xf32, #tpu.memory_space<vmem>>, %arg15: memref<1x16xf32, #tpu.memory_space<vmem>>, %arg16: memref<16x64xbf16, #tpu.memory_space<vmem>>, %arg17: memref<1x64xf32, #tpu.memory_space<vmem>>, %arg18: memref<64x16xbf16, #tpu.memory_space<vmem>>, %arg19: memref<1x16xf32, #tpu.memory_space<vmem>>, %arg20: memref<1x16xf32, #tpu.memory_space<vmem>>, %arg21: memref<1x16xf32, #tpu.memory_space<vmem>>, %arg22: memref<16x32xf32, #tpu.memory_space<vmem>>, %arg23: memref<16x16xf32, #tpu.memory_space<vmem>>, %arg24: memref<2x8x8xf32, #tpu.memory_space<vmem>>) attributes {dimension_semantics = [], scalar_prefetch = 0 : i64, scratch_operands = 0 : i64, tpu.core_type = #tpu.core_type<tc>} {
    %c0 = arith.constant 0 : index
    %c0_0 = arith.constant 0 : index
    %0 = vector.load %arg0[%c0, %c0_0] : memref<16x32xf32, #tpu.memory_space<vmem>>, vector<16x32xf32>
    %c0_1 = arith.constant 0 : index
    %c0_2 = arith.constant 0 : index
    %1 = vector.load %arg1[%c0_1, %c0_2] : memref<16x16xf32, #tpu.memory_space<vmem>>, vector<16x16xf32>
    %2 = arith.truncf %0 : vector<16x32xf32> to vector<16x32xbf16>
    %c0_3 = arith.constant 0 : index
    %c0_4 = arith.constant 0 : index
    %3 = vector.load %arg2[%c0_3, %c0_4] : memref<32x32xbf16, #tpu.memory_space<vmem>>, vector<32x32xbf16>
    %cst = arith.constant dense<0.000000e+00> : vector<16x32xf32>
    %4 = tpu.matmul %2, %3, %cst {dimension_numbers = #tpu.dot_dimension_numbers<[1], [0], [0], [1], [0, 0, 1, 1], [], []>} : vector<16x32xbf16>, vector<32x32xbf16>, vector<16x32xf32> -> vector<16x32xf32>
    %c0_5 = arith.constant 0 : index
    %c0_6 = arith.constant 0 : index
    %5 = vector.load %arg3[%c0_5, %c0_6] : memref<1x32xf32, #tpu.memory_space<vmem>>, vector<1x32xf32>
    %6 = vector.broadcast %5 : vector<1x32xf32> to vector<16x32xf32>
    %7 = arith.addf %4, %6 : vector<16x32xf32>
    %8 = arith.truncf %1 : vector<16x16xf32> to vector<16x16xbf16>
    %c0_7 = arith.constant 0 : index
    %c0_8 = arith.constant 0 : index
    %9 = vector.load %arg4[%c0_7, %c0_8] : memref<16x48xbf16, #tpu.memory_space<vmem>>, vector<16x48xbf16>
    %cst_9 = arith.constant dense<0.000000e+00> : vector<16x48xf32>
    %10 = tpu.matmul %8, %9, %cst_9 {dimension_numbers = #tpu.dot_dimension_numbers<[1], [0], [0], [1], [0, 0, 1, 1], [], []>} : vector<16x16xbf16>, vector<16x48xbf16>, vector<16x48xf32> -> vector<16x48xf32>
    %c0_10 = arith.constant 0 : index
    %c0_11 = arith.constant 0 : index
    %11 = vector.load %arg5[%c0_10, %c0_11] : memref<1x48xf32, #tpu.memory_space<vmem>>, vector<1x48xf32>
    %12 = vector.broadcast %11 : vector<1x48xf32> to vector<16x48xf32>
    %13 = arith.addf %10, %12 : vector<16x48xf32>
    %14 = vector.extract_strided_slice %7 {offsets = [0, 0], sizes = [16, 16], strides = [1, 1]} : vector<16x32xf32> to vector<16x16xf32>
    %15 = vector.shape_cast %14 : vector<16x16xf32> to vector<2x8x16xf32>
    %16 = arith.truncf %15 : vector<2x8x16xf32> to vector<2x8x16xbf16>
    %17 = vector.extract_strided_slice %7 {offsets = [0, 16], sizes = [16, 16], strides = [1, 1]} : vector<16x32xf32> to vector<16x16xf32>
    %18 = vector.shape_cast %17 : vector<16x16xf32> to vector<2x8x16xf32>
    %19 = arith.truncf %18 : vector<2x8x16xf32> to vector<2x8x16xbf16>
    %20 = vector.extract_strided_slice %13 {offsets = [0, 0], sizes = [16, 16], strides = [1, 1]} : vector<16x48xf32> to vector<16x16xf32>
    %21 = vector.shape_cast %20 : vector<16x16xf32> to vector<2x8x16xf32>
    %22 = arith.truncf %21 : vector<2x8x16xf32> to vector<2x8x16xbf16>
    %23 = vector.extract_strided_slice %13 {offsets = [0, 16], sizes = [16, 32], strides = [1, 1]} : vector<16x48xf32> to vector<16x32xf32>
    %24 = vector.shape_cast %23 : vector<16x32xf32> to vector<2x8x32xf32>
    %25 = arith.truncf %24 : vector<2x8x32xf32> to vector<2x8x32xbf16>
    "tpu.trace_start"() <{level = 10 : i32, message = "bqd,bkd->bqk"}> : () -> ()
    %cst_12 = arith.constant dense<0.000000e+00> : vector<2x8x8xf32>
    %26 = tpu.matmul %16, %22, %cst_12 {dimension_numbers = #tpu.dot_dimension_numbers<[2], [2], [1], [1], [0, 0, 0, 1, 1, 1], [0], [0]>} : vector<2x8x16xbf16>, vector<2x8x16xbf16>, vector<2x8x8xf32> -> vector<2x8x8xf32>
    "tpu.trace_stop"() : () -> ()
    %cst_13 = arith.constant 2.500000e-01 : f32
    %27 = vector.broadcast %cst_13 : f32 to vector<2x8x8xf32>
    %28 = arith.mulf %26, %27 : vector<2x8x8xf32>
    "tpu.trace_start"() <{level = 10 : i32, message = "bkd,bqd->bkq"}> : () -> ()
    %cst_14 = arith.constant dense<0.000000e+00> : vector<2x8x8xf32>
    %29 = tpu.matmul %22, %16, %cst_14 {dimension_numbers = #tpu.dot_dimension_numbers<[2], [2], [1], [1], [0, 0, 0, 1, 1, 1], [0], [0]>} : vector<2x8x16xbf16>, vector<2x8x16xbf16>, vector<2x8x8xf32> -> vector<2x8x8xf32>
    "tpu.trace_stop"() : () -> ()
    %cst_15 = arith.constant 2.500000e-01 : f32
    %30 = vector.broadcast %cst_15 : f32 to vector<2x8x8xf32>
    %31 = arith.mulf %29, %30 : vector<2x8x8xf32>
    %cst_16 = arith.constant dense<0xFF800000> : vector<2x8xf32>
    %32 = vector.multi_reduction <maximumf>, %28, %cst_16 [2] : vector<2x8x8xf32> to vector<2x8xf32>
    %33 = vector.shape_cast %32 : vector<2x8xf32> to vector<2x8x1xf32>
    %34 = vector.broadcast %33 : vector<2x8x1xf32> to vector<2x8x8xf32>
    %35 = arith.subf %28, %34 : vector<2x8x8xf32>
    %36 = math.exp %35 : vector<2x8x8xf32>
    %cst_17 = arith.constant dense<0.000000e+00> : vector<2x8xf32>
    %37 = vector.multi_reduction <add>, %36, %cst_17 [2] : vector<2x8x8xf32> to vector<2x8xf32>
    %38 = vector.shape_cast %37 : vector<2x8xf32> to vector<2x8x1xf32>
    %39 = tpu.reciprocal %38 {approx = true} : vector<2x8x1xf32> -> vector<2x8x1xf32>
    %40 = vector.broadcast %39 : vector<2x8x1xf32> to vector<2x8x8xf32>
    %41 = arith.mulf %36, %40 : vector<2x8x8xf32>
    %cst_18 = arith.constant dense<0xFF800000> : vector<2x8xf32>
    %42 = vector.multi_reduction <maximumf>, %31, %cst_18 [2] : vector<2x8x8xf32> to vector<2x8xf32>
    %43 = vector.shape_cast %42 : vector<2x8xf32> to vector<2x8x1xf32>
    %44 = vector.broadcast %43 : vector<2x8x1xf32> to vector<2x8x8xf32>
    %45 = arith.subf %31, %44 : vector<2x8x8xf32>
    %46 = math.exp %45 : vector<2x8x8xf32>
    %cst_19 = arith.constant dense<0.000000e+00> : vector<2x8xf32>
    %47 = vector.multi_reduction <add>, %46, %cst_19 [2] : vector<2x8x8xf32> to vector<2x8xf32>
    %48 = vector.shape_cast %47 : vector<2x8xf32> to vector<2x8x1xf32>
    %49 = tpu.reciprocal %48 {approx = true} : vector<2x8x1xf32> -> vector<2x8x1xf32>
    %50 = vector.broadcast %49 : vector<2x8x1xf32> to vector<2x8x8xf32>
    %51 = arith.mulf %46, %50 : vector<2x8x8xf32>
    %52 = arith.truncf %41 : vector<2x8x8xf32> to vector<2x8x8xbf16>
    "tpu.trace_start"() <{level = 10 : i32, message = "bqk,bkd->bqd"}> : () -> ()
    %cst_20 = arith.constant dense<0.000000e+00> : vector<2x8x32xf32>
    %53 = tpu.matmul %52, %25, %cst_20 {dimension_numbers = #tpu.dot_dimension_numbers<[2], [1], [1], [2], [0, 0, 0, 1, 1, 2], [0], [0]>} : vector<2x8x8xbf16>, vector<2x8x32xbf16>, vector<2x8x32xf32> -> vector<2x8x32xf32>
    "tpu.trace_stop"() : () -> ()
    %54 = arith.truncf %51 : vector<2x8x8xf32> to vector<2x8x8xbf16>
    "tpu.trace_start"() <{level = 10 : i32, message = "bkq,bqd->bkd"}> : () -> ()
    %cst_21 = arith.constant dense<0.000000e+00> : vector<2x8x16xf32>
    %55 = tpu.matmul %54, %19, %cst_21 {dimension_numbers = #tpu.dot_dimension_numbers<[2], [1], [1], [2], [0, 0, 0, 1, 1, 2], [0], [0]>} : vector<2x8x8xbf16>, vector<2x8x16xbf16>, vector<2x8x16xf32> -> vector<2x8x16xf32>
    "tpu.trace_stop"() : () -> ()
    %c0_22 = arith.constant 0 : index
    %c0_23 = arith.constant 0 : index
    %c0_24 = arith.constant 0 : index
    %56 = vector.load %arg24[%c0_22, %c0_23, %c0_24] : memref<2x8x8xf32, #tpu.memory_space<vmem>>, vector<2x8x8xf32>
    tpu.vector_store %arg24[%c0_22, %c0_23, %c0_24], %41 {strides = array<i32>} : memref<2x8x8xf32, #tpu.memory_space<vmem>>, vector<2x8x8xf32>,
    %57 = vector.shape_cast %53 : vector<2x8x32xf32> to vector<16x32xf32>
    %58 = arith.addf %0, %57 : vector<16x32xf32>
    %59 = vector.shape_cast %55 : vector<2x8x16xf32> to vector<16x16xf32>
    %60 = arith.addf %1, %59 : vector<16x16xf32>
    %c0_25 = arith.constant 0 : index
    %c0_26 = arith.constant 0 : index
    %61 = vector.load %arg6[%c0_25, %c0_26] : memref<1x32xf32, #tpu.memory_space<vmem>>, vector<1x32xf32>
    %c0_27 = arith.constant 0 : index
    %c0_28 = arith.constant 0 : index
    %62 = vector.load %arg7[%c0_27, %c0_28] : memref<1x32xf32, #tpu.memory_space<vmem>>, vector<1x32xf32>
    %c0_29 = arith.constant 0 : index
    %c0_30 = arith.constant 0 : index
    %63 = vector.load %arg8[%c0_29, %c0_30] : memref<32x128xbf16, #tpu.memory_space<vmem>>, vector<32x128xbf16>
    %c0_31 = arith.constant 0 : index
    %c0_32 = arith.constant 0 : index
    %64 = vector.load %arg9[%c0_31, %c0_32] : memref<1x128xf32, #tpu.memory_space<vmem>>, vector<1x128xf32>
    %c0_33 = arith.constant 0 : index
    %c0_34 = arith.constant 0 : index
    %65 = vector.load %arg10[%c0_33, %c0_34] : memref<128x32xbf16, #tpu.memory_space<vmem>>, vector<128x32xbf16>
    %c0_35 = arith.constant 0 : index
    %c0_36 = arith.constant 0 : index
    %66 = vector.load %arg11[%c0_35, %c0_36] : memref<1x32xf32, #tpu.memory_space<vmem>>, vector<1x32xf32>
    %c0_37 = arith.constant 0 : index
    %c0_38 = arith.constant 0 : index
    %67 = vector.load %arg12[%c0_37, %c0_38] : memref<1x32xf32, #tpu.memory_space<vmem>>, vector<1x32xf32>
    %c0_39 = arith.constant 0 : index
    %c0_40 = arith.constant 0 : index
    %68 = vector.load %arg13[%c0_39, %c0_40] : memref<1x32xf32, #tpu.memory_space<vmem>>, vector<1x32xf32>
    %cst_41 = arith.constant dense<0.000000e+00> : vector<16xf32>
    %69 = vector.multi_reduction <add>, %58, %cst_41 [1] : vector<16x32xf32> to vector<16xf32>
    %70 = vector.shape_cast %69 : vector<16xf32> to vector<16x1xf32>
    %cst_42 = arith.constant 3.200000e+01 : f32
    %71 = vector.broadcast %cst_42 : f32 to vector<16x1xf32>
    %72 = arith.divf %70, %71 : vector<16x1xf32>
    %73 = vector.broadcast %72 : vector<16x1xf32> to vector<16x32xf32>
    %74 = arith.subf %58, %73 : vector<16x32xf32>
    %75 = arith.mulf %74, %74 : vector<16x32xf32>
    %cst_43 = arith.constant dense<0.000000e+00> : vector<16xf32>
    %76 = vector.multi_reduction <add>, %75, %cst_43 [1] : vector<16x32xf32> to vector<16xf32>
    %77 = vector.shape_cast %76 : vector<16xf32> to vector<16x1xf32>
    %cst_44 = arith.constant 3.200000e+01 : f32
    %78 = vector.broadcast %cst_44 : f32 to vector<16x1xf32>
    %79 = arith.divf %77, %78 : vector<16x1xf32>
    %80 = vector.broadcast %72 : vector<16x1xf32> to vector<16x32xf32>
    %81 = arith.subf %58, %80 : vector<16x32xf32>
    %cst_45 = arith.constant 9.99999974E-6 : f32
    %82 = vector.broadcast %cst_45 : f32 to vector<16x1xf32>
    %83 = arith.addf %79, %82 : vector<16x1xf32>
    %84 = math.rsqrt %83 : vector<16x1xf32>
    %85 = vector.broadcast %84 : vector<16x1xf32> to vector<16x32xf32>
    %86 = arith.mulf %81, %85 : vector<16x32xf32>
    %87 = vector.broadcast %61 : vector<1x32xf32> to vector<16x32xf32>
    %88 = arith.mulf %86, %87 : vector<16x32xf32>
    %89 = vector.broadcast %62 : vector<1x32xf32> to vector<16x32xf32>
    %90 = arith.addf %88, %89 : vector<16x32xf32>
    %91 = arith.truncf %90 : vector<16x32xf32> to vector<16x32xbf16>
    %cst_46 = arith.constant dense<0.000000e+00> : vector<16x128xf32>
    %92 = tpu.matmul %91, %63, %cst_46 {dimension_numbers = #tpu.dot_dimension_numbers<[1], [0], [0], [1], [0, 0, 1, 1], [], []>} : vector<16x32xbf16>, vector<32x128xbf16>, vector<16x128xf32> -> vector<16x128xf32>
    %93 = vector.broadcast %64 : vector<1x128xf32> to vector<16x128xf32>
    %94 = arith.addf %92, %93 : vector<16x128xf32>
    %cst_47 = arith.constant 0.000000e+00 : f32
    %95 = vector.broadcast %cst_47 : f32 to vector<16x128xf32>
    %96 = arith.maximumf %94, %95 : vector<16x128xf32>
    %97 = arith.truncf %96 : vector<16x128xf32> to vector<16x128xbf16>
    %cst_48 = arith.constant dense<0.000000e+00> : vector<16x32xf32>
    %98 = tpu.matmul %97, %65, %cst_48 {dimension_numbers = #tpu.dot_dimension_numbers<[1], [0], [0], [1], [0, 0, 1, 1], [], []>} : vector<16x128xbf16>, vector<128x32xbf16>, vector<16x32xf32> -> vector<16x32xf32>
    %99 = vector.broadcast %66 : vector<1x32xf32> to vector<16x32xf32>
    %100 = arith.addf %98, %99 : vector<16x32xf32>
    %101 = arith.addf %58, %100 : vector<16x32xf32>
    %cst_49 = arith.constant dense<0.000000e+00> : vector<16xf32>
    %102 = vector.multi_reduction <add>, %101, %cst_49 [1] : vector<16x32xf32> to vector<16xf32>
    %103 = vector.shape_cast %102 : vector<16xf32> to vector<16x1xf32>
    %cst_50 = arith.constant 3.200000e+01 : f32
    %104 = vector.broadcast %cst_50 : f32 to vector<16x1xf32>
    %105 = arith.divf %103, %104 : vector<16x1xf32>
    %106 = vector.broadcast %105 : vector<16x1xf32> to vector<16x32xf32>
    %107 = arith.subf %101, %106 : vector<16x32xf32>
    %108 = arith.mulf %107, %107 : vector<16x32xf32>
    %cst_51 = arith.constant dense<0.000000e+00> : vector<16xf32>
    %109 = vector.multi_reduction <add>, %108, %cst_51 [1] : vector<16x32xf32> to vector<16xf32>
    %110 = vector.shape_cast %109 : vector<16xf32> to vector<16x1xf32>
    %cst_52 = arith.constant 3.200000e+01 : f32
    %111 = vector.broadcast %cst_52 : f32 to vector<16x1xf32>
    %112 = arith.divf %110, %111 : vector<16x1xf32>
    %113 = vector.broadcast %105 : vector<16x1xf32> to vector<16x32xf32>
    %114 = arith.subf %101, %113 : vector<16x32xf32>
    %cst_53 = arith.constant 9.99999974E-6 : f32
    %115 = vector.broadcast %cst_53 : f32 to vector<16x1xf32>
    %116 = arith.addf %112, %115 : vector<16x1xf32>
    %117 = math.rsqrt %116 : vector<16x1xf32>
    %118 = vector.broadcast %117 : vector<16x1xf32> to vector<16x32xf32>
    %119 = arith.mulf %114, %118 : vector<16x32xf32>
    %120 = vector.broadcast %67 : vector<1x32xf32> to vector<16x32xf32>
    %121 = arith.mulf %119, %120 : vector<16x32xf32>
    %122 = vector.broadcast %68 : vector<1x32xf32> to vector<16x32xf32>
    %123 = arith.addf %121, %122 : vector<16x32xf32>
    %c0_54 = arith.constant 0 : index
    %c0_55 = arith.constant 0 : index
    %124 = vector.load %arg22[%c0_54, %c0_55] : memref<16x32xf32, #tpu.memory_space<vmem>>, vector<16x32xf32>
    tpu.vector_store %arg22[%c0_54, %c0_55], %123 {strides = array<i32>} : memref<16x32xf32, #tpu.memory_space<vmem>>, vector<16x32xf32>,
    %c0_56 = arith.constant 0 : index
    %c0_57 = arith.constant 0 : index
    %125 = vector.load %arg14[%c0_56, %c0_57] : memref<1x16xf32, #tpu.memory_space<vmem>>, vector<1x16xf32>
    %c0_58 = arith.constant 0 : index
    %c0_59 = arith.constant 0 : index
    %126 = vector.load %arg15[%c0_58, %c0_59] : memref<1x16xf32, #tpu.memory_space<vmem>>, vector<1x16xf32>
    %c0_60 = arith.constant 0 : index
    %c0_61 = arith.constant 0 : index
    %127 = vector.load %arg16[%c0_60, %c0_61] : memref<16x64xbf16, #tpu.memory_space<vmem>>, vector<16x64xbf16>
    %c0_62 = arith.constant 0 : index
    %c0_63 = arith.constant 0 : index
    %128 = vector.load %arg17[%c0_62, %c0_63] : memref<1x64xf32, #tpu.memory_space<vmem>>, vector<1x64xf32>
    %c0_64 = arith.constant 0 : index
    %c0_65 = arith.constant 0 : index
    %129 = vector.load %arg18[%c0_64, %c0_65] : memref<64x16xbf16, #tpu.memory_space<vmem>>, vector<64x16xbf16>
    %c0_66 = arith.constant 0 : index
    %c0_67 = arith.constant 0 : index
    %130 = vector.load %arg19[%c0_66, %c0_67] : memref<1x16xf32, #tpu.memory_space<vmem>>, vector<1x16xf32>
    %c0_68 = arith.constant 0 : index
    %c0_69 = arith.constant 0 : index
    %131 = vector.load %arg20[%c0_68, %c0_69] : memref<1x16xf32, #tpu.memory_space<vmem>>, vector<1x16xf32>
    %c0_70 = arith.constant 0 : index
    %c0_71 = arith.constant 0 : index
    %132 = vector.load %arg21[%c0_70, %c0_71] : memref<1x16xf32, #tpu.memory_space<vmem>>, vector<1x16xf32>
    %cst_72 = arith.constant dense<0.000000e+00> : vector<16xf32>
    %133 = vector.multi_reduction <add>, %60, %cst_72 [1] : vector<16x16xf32> to vector<16xf32>
    %134 = vector.shape_cast %133 : vector<16xf32> to vector<16x1xf32>
    %cst_73 = arith.constant 1.600000e+01 : f32
    %135 = vector.broadcast %cst_73 : f32 to vector<16x1xf32>
    %136 = arith.divf %134, %135 : vector<16x1xf32>
    %137 = vector.broadcast %136 : vector<16x1xf32> to vector<16x16xf32>
    %138 = arith.subf %60, %137 : vector<16x16xf32>
    %139 = arith.mulf %138, %138 : vector<16x16xf32>
    %cst_74 = arith.constant dense<0.000000e+00> : vector<16xf32>
    %140 = vector.multi_reduction <add>, %139, %cst_74 [1] : vector<16x16xf32> to vector<16xf32>
    %141 = vector.shape_cast %140 : vector<16xf32> to vector<16x1xf32>
    %cst_75 = arith.constant 1.600000e+01 : f32
    %142 = vector.broadcast %cst_75 : f32 to vector<16x1xf32>
    %143 = arith.divf %141, %142 : vector<16x1xf32>
    %144 = vector.broadcast %136 : vector<16x1xf32> to vector<16x16xf32>
    %145 = arith.subf %60, %144 : vector<16x16xf32>
    %cst_76 = arith.constant 9.99999974E-6 : f32
    %146 = vector.broadcast %cst_76 : f32 to vector<16x1xf32>
    %147 = arith.addf %143, %146 : vector<16x1xf32>
    %148 = math.rsqrt %147 : vector<16x1xf32>
    %149 = vector.broadcast %148 : vector<16x1xf32> to vector<16x16xf32>
    %150 = arith.mulf %145, %149 : vector<16x16xf32>
    %151 = vector.broadcast %125 : vector<1x16xf32> to vector<16x16xf32>
    %152 = arith.mulf %150, %151 : vector<16x16xf32>
    %153 = vector.broadcast %126 : vector<1x16xf32> to vector<16x16xf32>
    %154 = arith.addf %152, %153 : vector<16x16xf32>
    %155 = arith.truncf %154 : vector<16x16xf32> to vector<16x16xbf16>
    %cst_77 = arith.constant dense<0.000000e+00> : vector<16x64xf32>
    %156 = tpu.matmul %155, %127, %cst_77 {dimension_numbers = #tpu.dot_dimension_numbers<[1], [0], [0], [1], [0, 0, 1, 1], [], []>} : vector<16x16xbf16>, vector<16x64xbf16>, vector<16x64xf32> -> vector<16x64xf32>
    %157 = vector.broadcast %128 : vector<1x64xf32> to vector<16x64xf32>
    %158 = arith.addf %156, %157 : vector<16x64xf32>
    %cst_78 = arith.constant 0.000000e+00 : f32
    %159 = vector.broadcast %cst_78 : f32 to vector<16x64xf32>
    %160 = arith.maximumf %158, %159 : vector<16x64xf32>
    %161 = arith.truncf %160 : vector<16x64xf32> to vector<16x64xbf16>
    %cst_79 = arith.constant dense<0.000000e+00> : vector<16x16xf32>
    %162 = tpu.matmul %161, %129, %cst_79 {dimension_numbers = #tpu.dot_dimension_numbers<[1], [0], [0], [1], [0, 0, 1, 1], [], []>} : vector<16x64xbf16>, vector<64x16xbf16>, vector<16x16xf32> -> vector<16x16xf32>
    %163 = vector.broadcast %130 : vector<1x16xf32> to vector<16x16xf32>
    %164 = arith.addf %162, %163 : vector<16x16xf32>
    %165 = arith.addf %60, %164 : vector<16x16xf32>
    %cst_80 = arith.constant dense<0.000000e+00> : vector<16xf32>
    %166 = vector.multi_reduction <add>, %165, %cst_80 [1] : vector<16x16xf32> to vector<16xf32>
    %167 = vector.shape_cast %166 : vector<16xf32> to vector<16x1xf32>
    %cst_81 = arith.constant 1.600000e+01 : f32
    %168 = vector.broadcast %cst_81 : f32 to vector<16x1xf32>
    %169 = arith.divf %167, %168 : vector<16x1xf32>
    %170 = vector.broadcast %169 : vector<16x1xf32> to vector<16x16xf32>
    %171 = arith.subf %165, %170 : vector<16x16xf32>
    %172 = arith.mulf %171, %171 : vector<16x16xf32>
    %cst_82 = arith.constant dense<0.000000e+00> : vector<16xf32>
    %173 = vector.multi_reduction <add>, %172, %cst_82 [1] : vector<16x16xf32> to vector<16xf32>
    %174 = vector.shape_cast %173 : vector<16xf32> to vector<16x1xf32>
    %cst_83 = arith.constant 1.600000e+01 : f32
    %175 = vector.broadcast %cst_83 : f32 to vector<16x1xf32>
    %176 = arith.divf %174, %175 : vector<16x1xf32>
    %177 = vector.broadcast %169 : vector<16x1xf32> to vector<16x16xf32>
    %178 = arith.subf %165, %177 : vector<16x16xf32>
    %cst_84 = arith.constant 9.99999974E-6 : f32
    %179 = vector.broadcast %cst_84 : f32 to vector<16x1xf32>
    %180 = arith.addf %176, %179 : vector<16x1xf32>
    %181 = math.rsqrt %180 : vector<16x1xf32>
    %182 = vector.broadcast %181 : vector<16x1xf32> to vector<16x16xf32>
    %183 = arith.mulf %178, %182 : vector<16x16xf32>
    %184 = vector.broadcast %131 : vector<1x16xf32> to vector<16x16xf32>
    %185 = arith.mulf %183, %184 : vector<16x16xf32>
    %186 = vector.broadcast %132 : vector<1x16xf32> to vector<16x16xf32>
    %187 = arith.addf %185, %186 : vector<16x16xf32>
    %c0_85 = arith.constant 0 : index
    %c0_86 = arith.constant 0 : index
    %188 = vector.load %arg23[%c0_85, %c0_86] : memref<16x16xf32, #tpu.memory_space<vmem>>, vector<16x16xf32>
    tpu.vector_store %arg23[%c0_85, %c0_86], %187 {strides = array<i32>} : memref<16x16xf32, #tpu.memory_space<vmem>>, vector<16x16xf32>,
    return
  }
}

</mosaic_0001>

<llo_original>
// kernel: tv_encoder_layer.1
$region0: #{tv_encoder_layer.1}
  #allocation0 [shape = 'u32[]', space=smem, size = 0x4, offset = 0x4, fixed_abs, tag = 'smem constant byte address 0x4 - core index']
  #allocation1 [shape = 'u32[144,128]{1,0:T(1,128)}', space=vmem, size = 0x12000, scoped, tag = 'internal scratch']
  %s0 = inlined_call_operand.vmem [shape: f32[16,32], index: 0, kind: input, shape index: {}]
  %s1 = inlined_call_operand.vmem [shape: f32[16,16], index: 1, kind: input, shape index: {}]
  %s2 = inlined_call_operand.vmem [shape: bf16[32,32], index: 2, kind: input, shape index: {}]
  %s3 = inlined_call_operand.vmem [shape: f32[1,32], index: 3, kind: input, shape index: {}]
  %s4 = inlined_call_operand.vmem [shape: bf16[16,48], index: 4, kind: input, shape index: {}]
  %s5 = inlined_call_operand.vmem [shape: f32[1,48], index: 5, kind: input, shape index: {}]
  %s6 = inlined_call_operand.vmem [shape: f32[1,32], index: 6, kind: input, shape index: {}]
  %s7 = inlined_call_operand.vmem [shape: f32[1,32], index: 7, kind: input, shape index: {}]
  %s8 = inlined_call_operand.vmem [shape: bf16[32,128], index: 8, kind: input, shape index: {}]
  %s9 = inlined_call_operand.vmem [shape: f32[1,128], index: 9, kind: input, shape index: {}]
  %s10 = inlined_call_operand.vmem [shape: bf16[128,32], index: 10, kind: input, shape index: {}]
  %s11 = inlined_call_operand.vmem [shape: f32[1,32], index: 11, kind: input, shape index: {}]
  %s12 = inlined_call_operand.vmem [shape: f32[1,32], index: 12, kind: input, shape index: {}]
  %s13 = inlined_call_operand.vmem [shape: f32[1,32], index: 13, kind: input, shape index: {}]
  %s14 = inlined_call_operand.vmem [shape: f32[1,16], index: 14, kind: input, shape index: {}]
  %s15 = inlined_call_operand.vmem [shape: f32[1,16], index: 15, kind: input, shape index: {}]
  %s16 = inlined_call_operand.vmem [shape: bf16[16,64], index: 16, kind: input, shape index: {}]
  %s17 = inlined_call_operand.vmem [shape: f32[1,64], index: 17, kind: input, shape index: {}]
  %s18 = inlined_call_operand.vmem [shape: bf16[64,16], index: 18, kind: input, shape index: {}]
  %s19 = inlined_call_operand.vmem [shape: f32[1,16], index: 19, kind: input, shape index: {}]
  %s20 = inlined_call_operand.vmem [shape: f32[1,16], index: 20, kind: input, shape index: {}]
  %s21 = inlined_call_operand.vmem [shape: f32[1,16], index: 21, kind: input, shape index: {}]
  %s22 = inlined_call_operand.hbm [shape: f32[16,32], index: 22, kind: output, shape index: {0}]
  %s23 = inlined_call_operand.hbm [shape: f32[16,16], index: 23, kind: output, shape index: {1}]
  %s24 = inlined_call_operand.hbm [shape: f32[2,8,8], index: 24, kind: output, shape index: {2}]
  %25 = xla_tuple %s22, %s23, %s24
  %s26 = sld [smem:[#allocation0]]
  $region114: #{tv_encoder_layer.1} parent=0
    _
  %s28 = ssub.s32 1, %s26
  %s29 = scalar_select 0, %s28, %s26
  $region1: #{tv_encoder_layer.1} parent=0
    #allocation2 [shape = 'u8[8192]{0}', space=vmem, size = 0x2000, scoped, tag = 'output window, operand 0, single buffered']
    #allocation3 [shape = 's32[1]{0}', space=sflag, size = 0x4, scoped, tag = 'scoped memory for tv_encoder_layer.1']
    #allocation4 [shape = 'u8[8192]{0}', space=vmem, size = 0x2000, scoped, tag = 'output window, operand 1, single buffered']
    #allocation5 [shape = 's32[1]{0}', space=sflag, size = 0x4, scoped, tag = 'scoped memory for tv_encoder_layer.1']
    #allocation6 [shape = 'u8[8192]{0}', space=vmem, size = 0x2000, scoped, tag = 'output window, operand 2, single buffered']
    %30 = vsyncpa [#allocation3], 0
    %31 = vsyncpa [#allocation5], 0
    // Predicated region
    $region2: #{tv_encoder_layer.1} parent=1 // pred_check
      _
    $region3: #{tv_encoder_layer.1} parent=1 // pred_check_branch
      %33 = sbr.rel (0) target = $region5
    $region4: #{tv_encoder_layer.1} parent=1 // pred_region
      _
    $region5: #{tv_encoder_layer.1} parent=1 // pred_fallthru
      _
    // Predicated region
    $region6: #{tv_encoder_layer.1} parent=1 // pred_check
      _
    $region7: #{tv_encoder_layer.1} parent=1 // pred_check_branch
      %35 = sbr.rel (0) target = $region9
    $region8: #{tv_encoder_layer.1} parent=1 // pred_region
      _
    $region9: #{tv_encoder_layer.1} parent=1 // pred_fallthru
      _
    // Predicated region
    $region10: #{tv_encoder_layer.1} parent=1 // pred_check
      _
    $region11: #{tv_encoder_layer.1} parent=1 // pred_check_branch
      %37 = sbr.rel (0) target = $region13
    $region12: #{tv_encoder_layer.1} parent=1 // pred_region
      _
    $region13: #{tv_encoder_layer.1} parent=1 // pred_fallthru
      _
    // Predicated region
    $region14: #{tv_encoder_layer.1} parent=1 // pred_check
      _
    $region15: #{tv_encoder_layer.1} parent=1 // pred_check_branch
      %39 = sbr.rel (0) target = $region17
    $region16: #{tv_encoder_layer.1} parent=1 // pred_region
      _
    $region17: #{tv_encoder_layer.1} parent=1 // pred_fallthru
      _
    // Predicated region
    $region18: #{tv_encoder_layer.1} parent=1 // pred_check
      _
    $region19: #{tv_encoder_layer.1} parent=1 // pred_check_branch
      %41 = sbr.rel (0) target = $region21
    $region20: #{tv_encoder_layer.1} parent=1 // pred_region
      _
    $region21: #{tv_encoder_layer.1} parent=1 // pred_fallthru
      _
    // Predicated region
    $region22: #{tv_encoder_layer.1} parent=1 // pred_check
      _
    $region23: #{tv_encoder_layer.1} parent=1 // pred_check_branch
      %43 = sbr.rel (0) target = $region25
    $region24: #{tv_encoder_layer.1} parent=1 // pred_region
      _
    $region25: #{tv_encoder_layer.1} parent=1 // pred_fallthru
      _
    // Predicated region
    $region26: #{tv_encoder_layer.1} parent=1 // pred_check
      _
    $region27: #{tv_encoder_layer.1} parent=1 // pred_check_branch
      %45 = sbr.rel (0) target = $region29
    $region28: #{tv_encoder_layer.1} parent=1 // pred_region
      _
    $region29: #{tv_encoder_layer.1} parent=1 // pred_fallthru
      _
    // Predicated region
    $region30: #{tv_encoder_layer.1} parent=1 // pred_check
      _
    $region31: #{tv_encoder_layer.1} parent=1 // pred_check_branch
      %47 = sbr.rel (0) target = $region33
    $region32: #{tv_encoder_layer.1} parent=1 // pred_region
      _
    $region33: #{tv_encoder_layer.1} parent=1 // pred_fallthru
      _
    // Predicated region
    $region34: #{tv_encoder_layer.1} parent=1 // pred_check
      _
    $region35: #{tv_encoder_layer.1} parent=1 // pred_check_branch
      %49 = sbr.rel (0) target = $region37
    $region36: #{tv_encoder_layer.1} parent=1 // pred_region
      _
    $region37: #{tv_encoder_layer.1} parent=1 // pred_fallthru
      _
    // Predicated region
    $region38: #{tv_encoder_layer.1} parent=1 // pred_check
      _
    $region39: #{tv_encoder_layer.1} parent=1 // pred_check_branch
      %51 = sbr.rel (0) target = $region41
    $region40: #{tv_encoder_layer.1} parent=1 // pred_region
      _
    $region41: #{tv_encoder_layer.1} parent=1 // pred_fallthru
      _
    // Predicated region
    $region42: #{tv_encoder_layer.1} parent=1 // pred_check
      _
    $region43: #{tv_encoder_layer.1} parent=1 // pred_check_branch
      %53 = sbr.rel (0) target = $region45
    $region44: #{tv_encoder_layer.1} parent=1 // pred_region
      _
    $region45: #{tv_encoder_layer.1} parent=1 // pred_fallthru
      _
    // Predicated region
    $region46: #{tv_encoder_layer.1} parent=1 // pred_check
      _
    $region47: #{tv_encoder_layer.1} parent=1 // pred_check_branch
      %55 = sbr.rel (0) target = $region49
    $region48: #{tv_encoder_layer.1} parent=1 // pred_region
      _
    $region49: #{tv_encoder_layer.1} parent=1 // pred_fallthru
      _
    // Predicated region
    $region50: #{tv_encoder_layer.1} parent=1 // pred_check
      _
    $region51: #{tv_encoder_layer.1} parent=1 // pred_check_branch
      %57 = sbr.rel (0) target = $region53
    $region52: #{tv_encoder_layer.1} parent=1 // pred_region
      _
    $region53: #{tv_encoder_layer.1} parent=1 // pred_fallthru
      _
    // Predicated region
    $region54: #{tv_encoder_layer.1} parent=1 // pred_check
      _
    $region55: #{tv_encoder_layer.1} parent=1 // pred_check_branch
      %59 = sbr.rel (0) target = $region57
    $region56: #{tv_encoder_layer.1} parent=1 // pred_region
      _
    $region57: #{tv_encoder_layer.1} parent=1 // pred_fallthru
      _
    // Predicated region
    $region58: #{tv_encoder_layer.1} parent=1 // pred_check
      _
    $region59: #{tv_encoder_layer.1} parent=1 // pred_check_branch
      %61 = sbr.rel (0) target = $region61
    $region60: #{tv_encoder_layer.1} parent=1 // pred_region
      _
    $region61: #{tv_encoder_layer.1} parent=1 // pred_fallthru
      _
    // Predicated region
    $region62: #{tv_encoder_layer.1} parent=1 // pred_check
      _
    $region63: #{tv_encoder_layer.1} parent=1 // pred_check_branch
      %63 = sbr.rel (0) target = $region65
    $region64: #{tv_encoder_layer.1} parent=1 // pred_region
      _
    $region65: #{tv_encoder_layer.1} parent=1 // pred_fallthru
      _
    // Predicated region
    $region66: #{tv_encoder_layer.1} parent=1 // pred_check
      _
    $region67: #{tv_encoder_layer.1} parent=1 // pred_check_branch
      %65 = sbr.rel (0) target = $region69
    $region68: #{tv_encoder_layer.1} parent=1 // pred_region
      _
    $region69: #{tv_encoder_layer.1} parent=1 // pred_fallthru
      _
    // Predicated region
    $region70: #{tv_encoder_layer.1} parent=1 // pred_check
      _
    $region71: #{tv_encoder_layer.1} parent=1 // pred_check_branch
      %67 = sbr.rel (0) target = $region73
    $region72: #{tv_encoder_layer.1} parent=1 // pred_region
      _
    $region73: #{tv_encoder_layer.1} parent=1 // pred_fallthru
      _
    // Predicated region
    $region74: #{tv_encoder_layer.1} parent=1 // pred_check
      _
    $region75: #{tv_encoder_layer.1} parent=1 // pred_check_branch
      %69 = sbr.rel (0) target = $region77
    $region76: #{tv_encoder_layer.1} parent=1 // pred_region
      _
    $region77: #{tv_encoder_layer.1} parent=1 // pred_fallthru
      _
    // Predicated region
    $region78: #{tv_encoder_layer.1} parent=1 // pred_check
      _
    $region79: #{tv_encoder_layer.1} parent=1 // pred_check_branch
      %71 = sbr.rel (0) target = $region81
    $region80: #{tv_encoder_layer.1} parent=1 // pred_region
      _
    $region81: #{tv_encoder_layer.1} parent=1 // pred_fallthru
      _
    // Predicated region
    $region82: #{tv_encoder_layer.1} parent=1 // pred_check
      _
    $region83: #{tv_encoder_layer.1} parent=1 // pred_check_branch
      %73 = sbr.rel (0) target = $region85
    $region84: #{tv_encoder_layer.1} parent=1 // pred_region
      _
    $region85: #{tv_encoder_layer.1} parent=1 // pred_fallthru
      _
    // Predicated region
    $region86: #{tv_encoder_layer.1} parent=1 // pred_check
      _
    $region87: #{tv_encoder_layer.1} parent=1 // pred_check_branch
      %75 = sbr.rel (0) target = $region89
    $region88: #{tv_encoder_layer.1} parent=1 // pred_region
      _
    $region89: #{tv_encoder_layer.1} parent=1 // pred_fallthru
      _
    %v77 = vld [vmem:[%s0] sm:$0xff]
    %v78 = vld [vmem:[%s0 + $0x8] sm:$0xff]
    %v79 = vld [vmem:[%s1] sm:$0xff]
    %v80 = vld [vmem:[%s1 + $0x8] sm:$0xff]
    %v81 = vpack.c.bf16 %v78, %v77
    %v82 = vld [vmem:[%s2] sm:$0xf]
    %v83 = vld [vmem:[%s2 + $0x4] sm:$0xf]
    %v84 = vld [vmem:[%s2 + $0x8] sm:$0xf]
    %v85 = vld [vmem:[%s2 + $0xc] sm:$0xf]
    %v86 = vld [vmem:[%s3] sm:$0x1]
    %v88 = vlaneseq
    %v89 = vshrl.u32 %v88, 7
    %v90 = vsub.s32 0, %v89
    %v91 = vrot.slane %v86, %v90
    %v97 = vunpack.c.l.b16 %v82
    %v98 = vunpack.c.l.b16 %v83
    %v99 = vunpack.c.l.b16 %v84
    %v100 = vunpack.c.l.b16 %v85
    %v101 = vpack.c.b16 %v98, %v97
    %v102 = vpack.c.b16 %v100, %v99
    %vm105 = vcmask 261120
    %v107 = vsel %vm105, %v81, 0
    %109 = vmatprep.subr.bf16.mxu0 0
    %110 = vmatpush1.bf16.msra.mxu0 %v101
    %111 = vmatprep.subr.bf16.mxu0 0
    %112 = vmatpush1.bf16.msra.mxu0 %v102
    %113 = vmatprep.subr.bf16.mxu0 0
    %114 = vmatpush1.bf16.msra.mxu0 0
    %115 = vmatprep.subr.bf16.mxu0 0
    %116 = vmatpush1.bf16.msra.mxu0 0
    %117 = vmatprep.subr.bf16.mxu0 0
    %118 = vmatpush1.bf16.msra.mxu0 0
    %119 = vmatprep.subr.bf16.mxu0 0
    %120 = vmatpush1.bf16.msra.mxu0 0
    %121 = vmatprep.subr.bf16.mxu0 0
    %122 = vmatpush1.bf16.msra.mxu0 0
    %123 = vmatprep.subr.bf16.mxu0 0
    %124 = vmatpush1.bf16.msra.mxu0 0
    %125 = vmatprep.subr.bf16.mxu0 0
    %126 = vmatpush1.bf16.msra.mxu0 0
    %127 = vmatprep.subr.bf16.mxu0 0
    %128 = vmatpush1.bf16.msra.mxu0 0
    %129 = vmatprep.subr.bf16.mxu0 0
    %130 = vmatpush1.bf16.msra.mxu0 0
    %131 = vmatprep.subr.bf16.mxu0 0
    %132 = vmatpush1.bf16.msra.mxu0 0
    %133 = vmatprep.subr.bf16.mxu0 0
    %134 = vmatpush1.bf16.msra.mxu0 0
    %135 = vmatprep.subr.bf16.mxu0 0
    %136 = vmatpush1.bf16.msra.mxu0 0
    %137 = vmatprep.subr.bf16.mxu0 0
    %138 = vmatpush1.bf16.msra.mxu0 0
    %139 = vmatprep.subr.bf16.mxu0 0
    %140 = vmatpush1.bf16.msra.mxu0 0
    %141 = vmatprep.mubr.bf16.mxu0 0
    %142 = vmatmul.mubr.bf16.gmra.mrb[0].mxu0 %v107
    %v143 = vpop.f32.mrb[0].mxu0
    %v144 = vadd.f32 %v91, %v143
    %v145 = vpop.f32.mrb[0].mxu0
    %v146 = vpop.f32.mrb[0].mxu0
    %v147 = vadd.f32 %v91, %v146
    %v148 = vpop.f32.mrb[0].mxu0
    %149 = vdwg.mxu0
    %v150 = vpack.c.bf16 %v80, %v79
    %v151 = vld [vmem:[%s4] sm:$0xf]
    %v152 = vld [vmem:[%s4 + $0x4] sm:$0xf]
    %v153 = vld [vmem:[%s5] sm:$0x1]
    %v155 = vlaneseq
    %v156 = vshrl.u32 %v155, 7
    %v157 = vsub.s32 0, %v156
    %v158 = vrot.slane %v153, %v157
    %v162 = vunpack.c.l.b16 %v151
    %v163 = vunpack.c.l.b16 %v152
    %v164 = vpack.c.b16 %v163, %v162
    %vm166 = vcmask 130048
    %v168 = vsel %vm166, %v150, 0
    %170 = vmatprep.subr.bf16.mxu0 0
    %171 = vmatpush1.bf16.msra.mxu0 %v164
    %172 = vmatprep.subr.bf16.mxu0 0
    %173 = vmatpush1.bf16.msra.mxu0 0
    %174 = vmatprep.subr.bf16.mxu0 0
    %175 = vmatpush1.bf16.msra.mxu0 0
    %176 = vmatprep.subr.bf16.mxu0 0
    %177 = vmatpush1.bf16.msra.mxu0 0
    %178 = vmatprep.subr.bf16.mxu0 0
    %179 = vmatpush1.bf16.msra.mxu0 0
    %180 = vmatprep.subr.bf16.mxu0 0
    %181 = vmatpush1.bf16.msra.mxu0 0
    %182 = vmatprep.subr.bf16.mxu0 0
    %183 = vmatpush1.bf16.msra.mxu0 0
    %184 = vmatprep.subr.bf16.mxu0 0
    %185 = vmatpush1.bf16.msra.mxu0 0
    %186 = vmatprep.subr.bf16.mxu0 0
    %187 = vmatpush1.bf16.msra.mxu0 0
    %188 = vmatprep.subr.bf16.mxu0 0
    %189 = vmatpush1.bf16.msra.mxu0 0
    %190 = vmatprep.subr.bf16.mxu0 0
    %191 = vmatpush1.bf16.msra.mxu0 0
    %192 = vmatprep.subr.bf16.mxu0 0
    %193 = vmatpush1.bf16.msra.mxu0 0
    %194 = vmatprep.subr.bf16.mxu0 0
    %195 = vmatpush1.bf16.msra.mxu0 0
    %196 = vmatprep.subr.bf16.mxu0 0
    %197 = vmatpush1.bf16.msra.mxu0 0
    %198 = vmatprep.subr.bf16.mxu0 0
    %199 = vmatpush1.bf16.msra.mxu0 0
    %200 = vmatprep.subr.bf16.mxu0 0
    %201 = vmatpush1.bf16.msra.mxu0 0
    %202 = vmatprep.mubr.bf16.mxu0 0
    %203 = vmatmul.mubr.bf16.gmra.mrb[0].mxu0 %v168
    %v204 = vpop.f32.mrb[0].mxu0
    %v205 = vadd.f32 %v158, %v204
    %v206 = vpop.f32.mrb[0].mxu0
    %v207 = vpop.f32.mrb[0].mxu0
    %v208 = vadd.f32 %v158, %v207
    %v209 = vpop.f32.mrb[0].mxu0
    %210 = vdwg.mxu0
    %v211 = vpack.c.bf16 %v144, %v144
    %v212 = vpack.c.bf16 %v147, %v147
    %v213 = vpack.c.bf16 %v205, %v205
    %v214 = vpack.c.bf16 %v208, %v208
    %v216 = vsel %vm166, %v211, 0
    %v219 = vsel %vm166, %v213, 0
    %221 = vmatprep.subr.bf16.mxu0 0
    %222 = vmatpush1.bf16.xpose.msra.mxu0 %v219
    %223 = vmatprep.subr.bf16.mxu0 0
    %224 = vmatpush1.bf16.xpose.msra.mxu0 0
    %225 = vmatprep.subr.bf16.mxu0 0
    %226 = vmatpush1.bf16.xpose.msra.mxu0 0
    %227 = vmatprep.subr.bf16.mxu0 0
    %228 = vmatpush1.bf16.xpose.msra.mxu0 0
    %229 = vmatprep.subr.bf16.mxu0 0
    %230 = vmatpush1.bf16.xpose.msra.mxu0 0
    %231 = vmatprep.subr.bf16.mxu0 0
    %232 = vmatpush1.bf16.xpose.msra.mxu0 0
    %233 = vmatprep.subr.bf16.mxu0 0
    %234 = vmatpush1.bf16.xpose.msra.mxu0 0
    %235 = vmatprep.subr.bf16.mxu0 0
    %236 = vmatpush1.bf16.xpose.msra.mxu0 0
    %237 = vmatprep.subr.bf16.mxu0 0
    %238 = vmatpush1.bf16.xpose.msra.mxu0 0
    %239 = vmatprep.subr.bf16.mxu0 0
    %240 = vmatpush1.bf16.xpose.msra.mxu0 0
    %241 = vmatprep.subr.bf16.mxu0 0
    %242 = vmatpush1.bf16.xpose.msra.mxu0 0
    %243 = vmatprep.subr.bf16.mxu0 0
    %244 = vmatpush1.bf16.xpose.msra.mxu0 0
    %245 = vmatprep.subr.bf16.mxu0 0
    %246 = vmatpush1.bf16.xpose.msra.mxu0 0
    %247 = vmatprep.subr.bf16.mxu0 0
    %248 = vmatpush1.bf16.xpose.msra.mxu0 0
    %249 = vmatprep.subr.bf16.mxu0 0
    %250 = vmatpush1.bf16.xpose.msra.mxu0 0
    %251 = vmatprep.subr.bf16.mxu0 0
    %252 = vmatpush1.bf16.xpose.msra.mxu0 0
    %253 = vmatprep.mubr.bf16.mxu0 0
    %254 = vmatmul.mubr.bf16.gmra.mrb[0].mxu0 %v216
    %v255 = vpop.f32.mrb[0].mxu0
    %v256 = vadd.f32 0.0, %v255
    %v257 = vpop.f32.mrb[0].mxu0
    %v258 = vpop.f32.mrb[0].mxu0
    %v259 = vpop.f32.mrb[0].mxu0
    %260 = vdwg.mxu0
    %v262 = vsel %vm166, %v212, 0
    %v265 = vsel %vm166, %v214, 0
    %267 = vmatprep.subr.bf16.mxu0 0
    %268 = vmatpush1.bf16.xpose.msra.mxu0 %v265
    %269 = vmatprep.subr.bf16.mxu0 0
    %270 = vmatpush1.bf16.xpose.msra.mxu0 0
    %271 = vmatprep.subr.bf16.mxu0 0
    %272 = vmatpush1.bf16.xpose.msra.mxu0 0
    %273 = vmatprep.subr.bf16.mxu0 0
    %274 = vmatpush1.bf16.xpose.msra.mxu0 0
    %275 = vmatprep.subr.bf16.mxu0 0
    %276 = vmatpush1.bf16.xpose.msra.mxu0 0
    %277 = vmatprep.subr.bf16.mxu0 0
    %278 = vmatpush1.bf16.xpose.msra.mxu0 0
    %279 = vmatprep.subr.bf16.mxu0 0
    %280 = vmatpush1.bf16.xpose.msra.mxu0 0
    %281 = vmatprep.subr.bf16.mxu0 0
    %282 = vmatpush1.bf16.xpose.msra.mxu0 0
    %283 = vmatprep.subr.bf16.mxu0 0
    %284 = vmatpush1.bf16.xpose.msra.mxu0 0
    %285 = vmatprep.subr.bf16.mxu0 0
    %286 = vmatpush1.bf16.xpose.msra.mxu0 0
    %287 = vmatprep.subr.bf16.mxu0 0
    %288 = vmatpush1.bf16.xpose.msra.mxu0 0
    %289 = vmatprep.subr.bf16.mxu0 0
    %290 = vmatpush1.bf16.xpose.msra.mxu0 0
    %291 = vmatprep.subr.bf16.mxu0 0
    %292 = vmatpush1.bf16.xpose.msra.mxu0 0
    %293 = vmatprep.subr.bf16.mxu0 0
    %294 = vmatpush1.bf16.xpose.msra.mxu0 0
    %295 = vmatprep.subr.bf16.mxu0 0
    %296 = vmatpush1.bf16.xpose.msra.mxu0 0
    %297 = vmatprep.subr.bf16.mxu0 0
    %298 = vmatpush1.bf16.xpose.msra.mxu0 0
    %299 = vmatprep.mubr.bf16.mxu0 0
    %300 = vmatmul.mubr.bf16.gmra.mrb[0].mxu0 %v262
    %v301 = vpop.f32.mrb[0].mxu0
    %v302 = vadd.f32 0.0, %v301
    %v303 = vpop.f32.mrb[0].mxu0
    %v304 = vpop.f32.mrb[0].mxu0
    %v305 = vpop.f32.mrb[0].mxu0
    %306 = vdwg.mxu0
    %v307 = vmul.f32 %v256, 0.25
    %v308 = vmul.f32 %v302, 0.25
    %309 = vmatprep.subr.bf16.mxu0 0
    %310 = vmatpush1.bf16.xpose.msra.mxu0 %v216
    %311 = vmatprep.subr.bf16.mxu0 0
    %312 = vmatpush1.bf16.xpose.msra.mxu0 0
    %313 = vmatprep.subr.bf16.mxu0 0
    %314 = vmatpush1.bf16.xpose.msra.mxu0 0
    %315 = vmatprep.subr.bf16.mxu0 0
    %316 = vmatpush1.bf16.xpose.msra.mxu0 0
    %317 = vmatprep.subr.bf16.mxu0 0
    %318 = vmatpush1.bf16.xpose.msra.mxu0 0
    %319 = vmatprep.subr.bf16.mxu0 0
    %320 = vmatpush1.bf16.xpose.msra.mxu0 0
    %321 = vmatprep.subr.bf16.mxu0 0
    %322 = vmatpush1.bf16.xpose.msra.mxu0 0
    %323 = vmatprep.subr.bf16.mxu0 0
    %324 = vmatpush1.bf16.xpose.msra.mxu0 0
    %325 = vmatprep.subr.bf16.mxu0 0
    %326 = vmatpush1.bf16.xpose.msra.mxu0 0
    %327 = vmatprep.subr.bf16.mxu0 0
    %328 = vmatpush1.bf16.xpose.msra.mxu0 0
    %329 = vmatprep.subr.bf16.mxu0 0
    %330 = vmatpush1.bf16.xpose.msra.mxu0 0
    %331 = vmatprep.subr.bf16.mxu0 0
    %332 = vmatpush1.bf16.xpose.msra.mxu0 0
    %333 = vmatprep.subr.bf16.mxu0 0
    %334 = vmatpush1.bf16.xpose.msra.mxu0 0
    %335 = vmatprep.subr.bf16.mxu0 0
    %336 = vmatpush1.bf16.xpose.msra.mxu0 0
    %337 = vmatprep.subr.bf16.mxu0 0
    %338 = vmatpush1.bf16.xpose.msra.mxu0 0
    %339 = vmatprep.subr.bf16.mxu0 0
    %340 = vmatpush1.bf16.xpose.msra.mxu0 0
    %341 = vmatprep.mubr.bf16.mxu0 0
    %342 = vmatmul.mubr.bf16.gmra.mrb[0].mxu0 %v219
    %v343 = vpop.f32.mrb[0].mxu0
    %v344 = vadd.f32 0.0, %v343
    %v345 = vpop.f32.mrb[0].mxu0
    %v346 = vpop.f32.mrb[0].mxu0
    %v347 = vpop.f32.mrb[0].mxu0
    %348 = vdwg.mxu0
    %349 = vmatprep.subr.bf16.mxu0 0
    %350 = vmatpush1.bf16.xpose.msra.mxu0 %v262
    %351 = vmatprep.subr.bf16.mxu0 0
    %352 = vmatpush1.bf16.xpose.msra.mxu0 0
    %353 = vmatprep.subr.bf16.mxu0 0
    %354 = vmatpush1.bf16.xpose.msra.mxu0 0
    %355 = vmatprep.subr.bf16.mxu0 0
    %356 = vmatpush1.bf16.xpose.msra.mxu0 0
    %357 = vmatprep.subr.bf16.mxu0 0
    %358 = vmatpush1.bf16.xpose.msra.mxu0 0
    %359 = vmatprep.subr.bf16.mxu0 0
    %360 = vmatpush1.bf16.xpose.msra.mxu0 0
    %361 = vmatprep.subr.bf16.mxu0 0
    %362 = vmatpush1.bf16.xpose.msra.mxu0 0
    %363 = vmatprep.subr.bf16.mxu0 0
    %364 = vmatpush1.bf16.xpose.msra.mxu0 0
    %365 = vmatprep.subr.bf16.mxu0 0
    %366 = vmatpush1.bf16.xpose.msra.mxu0 0
    %367 = vmatprep.subr.bf16.mxu0 0
    %368 = vmatpush1.bf16.xpose.msra.mxu0 0
    %369 = vmatprep.subr.bf16.mxu0 0
    %370 = vmatpush1.bf16.xpose.msra.mxu0 0
    %371 = vmatprep.subr.bf16.mxu0 0
    %372 = vmatpush1.bf16.xpose.msra.mxu0 0
    %373 = vmatprep.subr.bf16.mxu0 0
    %374 = vmatpush1.bf16.xpose.msra.mxu0 0
    %375 = vmatprep.subr.bf16.mxu0 0
    %376 = vmatpush1.bf16.xpose.msra.mxu0 0
    %377 = vmatprep.subr.bf16.mxu0 0
    %378 = vmatpush1.bf16.xpose.msra.mxu0 0
    %379 = vmatprep.subr.bf16.mxu0 0
    %380 = vmatpush1.bf16.xpose.msra.mxu0 0
    %381 = vmatprep.mubr.bf16.mxu0 0
    %382 = vmatmul.mubr.bf16.gmra.mrb[0].mxu0 %v265
    %v383 = vpop.f32.mrb[0].mxu0
    %v384 = vadd.f32 0.0, %v383
    %v385 = vpop.f32.mrb[0].mxu0
    %v386 = vpop.f32.mrb[0].mxu0
    %v387 = vpop.f32.mrb[0].mxu0
    %388 = vdwg.mxu0
    %v389 = vmul.f32 %v344, 0.25
    %v390 = vmul.f32 %v384, 0.25
    %vm391 = vcmask 64512
    %v392 = vsel %vm391, %v307, -inf
    %393 = vmax.xlane.f32.xlu0 %v392
    %v394 = vpop.xlane.xlu0 %393
    %v395 = vsel %vm391, %v308, -inf
    %396 = vmax.xlane.f32.xlu0 %v395
    %v397 = vpop.xlane.xlu0 %396
    %v398 = vsub.f32 %v307, %v394
    %v399 = vsub.f32 %v308, %v397
    %v400 = vmul.f32 %v398, 1.442695
    %v401 = vpow.pop %v400
    %v402 = vmul.f32 %v399, 1.442695
    %v403 = vpow.pop %v402
    %v404 = vsel %vm391, %v401, 0.0
    %405 = vadd.xlane.f32.xlu0 %v404
    %v406 = vpop.xlane.xlu0 %405
    %v407 = vsel %vm391, %v403, 0.0
    %408 = vadd.xlane.f32.xlu0 %v407
    %v409 = vpop.xlane.xlu0 %408
    %v410 = vrcp.pop %v406
    %v411 = vrcp.pop %v409
    %v412 = vmul.f32 %v401, %v410
    %v413 = vmul.f32 %v403, %v411
    %v414 = vsel %vm391, %v389, -inf
    %415 = vmax.xlane.f32.xlu0 %v414
    %v416 = vpop.xlane.xlu0 %415
    %v417 = vsel %vm391, %v390, -inf
    %418 = vmax.xlane.f32.xlu0 %v417
    %v419 = vpop.xlane.xlu0 %418
    %v420 = vsub.f32 %v389, %v416
    %v421 = vsub.f32 %v390, %v419
    %v422 = vmul.f32 %v420, 1.442695
    %v423 = vpow.pop %v422
    %v424 = vmul.f32 %v421, 1.442695
    %v425 = vpow.pop %v424
    %v426 = vsel %vm391, %v423, 0.0
    %427 = vadd.xlane.f32.xlu0 %v426
    %v428 = vpop.xlane.xlu0 %427
    %v429 = vsel %vm391, %v425, 0.0
    %430 = vadd.xlane.f32.xlu0 %v429
    %v431 = vpop.xlane.xlu0 %430
    %v432 = vrcp.pop %v428
    %v433 = vrcp.pop %v431
    %v434 = vmul.f32 %v423, %v432
    %v435 = vmul.f32 %v425, %v433
    %v436 = vpack.c.bf16 %v412, %v412
    %v437 = vpack.c.bf16 %v413, %v413
    %439 = vrot.lane.b32.xlu0 %v213, 112
    %v440 = vpop.permute.xlu0 %439
    %v442 = vsel %vm391, %v436, 0
    %vm444 = vcmask 1043456
    %v446 = vsel %vm444, %v440, 0
    %448 = vmatprep.subr.bf16.mxu0 0
    %449 = vmatpush1.bf16.msra.mxu0 %v446
    %450 = vmatprep.subr.bf16.mxu0 0
    %451 = vmatpush1.bf16.msra.mxu0 0
    %452 = vmatprep.subr.bf16.mxu0 0
    %453 = vmatpush1.bf16.msra.mxu0 0
    %454 = vmatprep.subr.bf16.mxu0 0
    %455 = vmatpush1.bf16.msra.mxu0 0
    %456 = vmatprep.subr.bf16.mxu0 0
    %457 = vmatpush1.bf16.msra.mxu0 0
    %458 = vmatprep.subr.bf16.mxu0 0
    %459 = vmatpush1.bf16.msra.mxu0 0
    %460 = vmatprep.subr.bf16.mxu0 0
    %461 = vmatpush1.bf16.msra.mxu0 0
    %462 = vmatprep.subr.bf16.mxu0 0
    %463 = vmatpush1.bf16.msra.mxu0 0
    %464 = vmatprep.subr.bf16.mxu0 0
    %465 = vmatpush1.bf16.msra.mxu0 0
    %466 = vmatprep.subr.bf16.mxu0 0
    %467 = vmatpush1.bf16.msra.mxu0 0
    %468 = vmatprep.subr.bf16.mxu0 0
    %469 = vmatpush1.bf16.msra.mxu0 0
    %470 = vmatprep.subr.bf16.mxu0 0
    %471 = vmatpush1.bf16.msra.mxu0 0
    %472 = vmatprep.subr.bf16.mxu0 0
    %473 = vmatpush1.bf16.msra.mxu0 0
    %474 = vmatprep.subr.bf16.mxu0 0
    %475 = vmatpush1.bf16.msra.mxu0 0
    %476 = vmatprep.subr.bf16.mxu0 0
    %477 = vmatpush1.bf16.msra.mxu0 0
    %478 = vmatprep.subr.bf16.mxu0 0
    %479 = vmatpush1.bf16.msra.mxu0 0
    %480 = vmatprep.mubr.bf16.mxu0 0
    %481 = vmatmul.mubr.bf16.gmra.mrb[0].mxu0 %v442
    %v482 = vpop.f32.mrb[0].mxu0
    %v483 = vadd.f32 0.0, %v482
    %v484 = vpop.f32.mrb[0].mxu0
    %v485 = vpop.f32.mrb[0].mxu0
    %v486 = vpop.f32.mrb[0].mxu0
    %487 = vdwg.mxu0
    %489 = vrot.lane.b32.xlu0 %v214, 112
    %v490 = vpop.permute.xlu0 %489
    %v492 = vsel %vm391, %v437, 0
    %v495 = vsel %vm444, %v490, 0
    %497 = vmatprep.subr.bf16.mxu0 0
    %498 = vmatpush1.bf16.msra.mxu0 %v495
    %499 = vmatprep.subr.bf16.mxu0 0
    %500 = vmatpush1.bf16.msra.mxu0 0
    %501 = vmatprep.subr.bf16.mxu0 0
    %502 = vmatpush1.bf16.msra.mxu0 0
    %503 = vmatprep.subr.bf16.mxu0 0
    %504 = vmatpush1.bf16.msra.mxu0 0
    %505 = vmatprep.subr.bf16.mxu0 0
    %506 = vmatpush1.bf16.msra.mxu0 0
    %507 = vmatprep.subr.bf16.mxu0 0
    %508 = vmatpush1.bf16.msra.mxu0 0
    %509 = vmatprep.subr.bf16.mxu0 0
    %510 = vmatpush1.bf16.msra.mxu0 0
    %511 = vmatprep.subr.bf16.mxu0 0
    %512 = vmatpush1.bf16.msra.mxu0 0
    %513 = vmatprep.subr.bf16.mxu0 0
    %514 = vmatpush1.bf16.msra.mxu0 0
    %515 = vmatprep.subr.bf16.mxu0 0
    %516 = vmatpush1.bf16.msra.mxu0 0
    %517 = vmatprep.subr.bf16.mxu0 0
    %518 = vmatpush1.bf16.msra.mxu0 0
    %519 = vmatprep.subr.bf16.mxu0 0
    %520 = vmatpush1.bf16.msra.mxu0 0
    %521 = vmatprep.subr.bf16.mxu0 0
    %522 = vmatpush1.bf16.msra.mxu0 0
    %523 = vmatprep.subr.bf16.mxu0 0
    %524 = vmatpush1.bf16.msra.mxu0 0
    %525 = vmatprep.subr.bf16.mxu0 0
    %526 = vmatpush1.bf16.msra.mxu0 0
    %527 = vmatprep.subr.bf16.mxu0 0
    %528 = vmatpush1.bf16.msra.mxu0 0
    %529 = vmatprep.mubr.bf16.mxu0 0
    %530 = vmatmul.mubr.bf16.gmra.mrb[0].mxu0 %v492
    %v531 = vpop.f32.mrb[0].mxu0
    %v532 = vadd.f32 0.0, %v531
    %v533 = vpop.f32.mrb[0].mxu0
    %v534 = vpop.f32.mrb[0].mxu0
    %v535 = vpop.f32.mrb[0].mxu0
    %536 = vdwg.mxu0
    %v537 = vpack.c.bf16 %v434, %v434
    %v538 = vpack.c.bf16 %v435, %v435
    %540 = vrot.lane.b32.xlu0 %v211, 112
    %v541 = vpop.permute.xlu0 %540
    %v543 = vsel %vm391, %v537, 0
    %v546 = vsel %vm444, %v541, 0
    %548 = vmatprep.subr.bf16.mxu0 0
    %549 = vmatpush1.bf16.msra.mxu0 %v546
    %550 = vmatprep.subr.bf16.mxu0 0
    %551 = vmatpush1.bf16.msra.mxu0 0
    %552 = vmatprep.subr.bf16.mxu0 0
    %553 = vmatpush1.bf16.msra.mxu0 0
    %554 = vmatprep.subr.bf16.mxu0 0
    %555 = vmatpush1.bf16.msra.mxu0 0
    %556 = vmatprep.subr.bf16.mxu0 0
    %557 = vmatpush1.bf16.msra.mxu0 0
    %558 = vmatprep.subr.bf16.mxu0 0
    %559 = vmatpush1.bf16.msra.mxu0 0
    %560 = vmatprep.subr.bf16.mxu0 0
    %561 = vmatpush1.bf16.msra.mxu0 0
    %562 = vmatprep.subr.bf16.mxu0 0
    %563 = vmatpush1.bf16.msra.mxu0 0
    %564 = vmatprep.subr.bf16.mxu0 0
    %565 = vmatpush1.bf16.msra.mxu0 0
    %566 = vmatprep.subr.bf16.mxu0 0
    %567 = vmatpush1.bf16.msra.mxu0 0
    %568 = vmatprep.subr.bf16.mxu0 0
    %569 = vmatpush1.bf16.msra.mxu0 0
    %570 = vmatprep.subr.bf16.mxu0 0
    %571 = vmatpush1.bf16.msra.mxu0 0
    %572 = vmatprep.subr.bf16.mxu0 0
    %573 = vmatpush1.bf16.msra.mxu0 0
    %574 = vmatprep.subr.bf16.mxu0 0
    %575 = vmatpush1.bf16.msra.mxu0 0
    %576 = vmatprep.subr.bf16.mxu0 0
    %577 = vmatpush1.bf16.msra.mxu0 0
    %578 = vmatprep.subr.bf16.mxu0 0
    %579 = vmatpush1.bf16.msra.mxu0 0
    %580 = vmatprep.mubr.bf16.mxu0 0
    %581 = vmatmul.mubr.bf16.gmra.mrb[0].mxu0 %v543
    %v582 = vpop.f32.mrb[0].mxu0
    %v583 = vadd.f32 0.0, %v582
    %v584 = vpop.f32.mrb[0].mxu0
    %v585 = vpop.f32.mrb[0].mxu0
    %v586 = vpop.f32.mrb[0].mxu0
    %587 = vdwg.mxu0
    %589 = vrot.lane.b32.xlu0 %v212, 112
    %v590 = vpop.permute.xlu0 %589
    %v592 = vsel %vm391, %v538, 0
    %v595 = vsel %vm444, %v590, 0
    %597 = vmatprep.subr.bf16.mxu0 0
    %598 = vmatpush1.bf16.msra.mxu0 %v595
    %599 = vmatprep.subr.bf16.mxu0 0
    %600 = vmatpush1.bf16.msra.mxu0 0
    %601 = vmatprep.subr.bf16.mxu0 0
    %602 = vmatpush1.bf16.msra.mxu0 0
    %603 = vmatprep.subr.bf16.mxu0 0
    %604 = vmatpush1.bf16.msra.mxu0 0
    %605 = vmatprep.subr.bf16.mxu0 0
    %606 = vmatpush1.bf16.msra.mxu0 0
    %607 = vmatprep.subr.bf16.mxu0 0
    %608 = vmatpush1.bf16.msra.mxu0 0
    %609 = vmatprep.subr.bf16.mxu0 0
    %610 = vmatpush1.bf16.msra.mxu0 0
    %611 = vmatprep.subr.bf16.mxu0 0
    %612 = vmatpush1.bf16.msra.mxu0 0
    %613 = vmatprep.subr.bf16.mxu0 0
    %614 = vmatpush1.bf16.msra.mxu0 0
    %615 = vmatprep.subr.bf16.mxu0 0
    %616 = vmatpush1.bf16.msra.mxu0 0
    %617 = vmatprep.subr.bf16.mxu0 0
    %618 = vmatpush1.bf16.msra.mxu0 0
    %619 = vmatprep.subr.bf16.mxu0 0
    %620 = vmatpush1.bf16.msra.mxu0 0
    %621 = vmatprep.subr.bf16.mxu0 0
    %622 = vmatpush1.bf16.msra.mxu0 0
    %623 = vmatprep.subr.bf16.mxu0 0
    %624 = vmatpush1.bf16.msra.mxu0 0
    %625 = vmatprep.subr.bf16.mxu0 0
    %626 = vmatpush1.bf16.msra.mxu0 0
    %627 = vmatprep.subr.bf16.mxu0 0
    %628 = vmatpush1.bf16.msra.mxu0 0
    %629 = vmatprep.mubr.bf16.mxu0 0
    %630 = vmatmul.mubr.bf16.gmra.mrb[0].mxu0 %v592
    %v631 = vpop.f32.mrb[0].mxu0
    %v632 = vadd.f32 0.0, %v631
    %v633 = vpop.f32.mrb[0].mxu0
    %v634 = vpop.f32.mrb[0].mxu0
    %v635 = vpop.f32.mrb[0].mxu0
    %636 = vdwg.mxu0
    %637 = vst.msk [vmem:[#allocation6] sm:$0xff] %vm391, %v412
    %638 = vst.msk [vmem:[#allocation6 + $0x8] sm:$0xff] %vm391, %v413
    %v639 = vadd.f32 %v77, %v483
    %v640 = vadd.f32 %v78, %v532
    %v641 = vadd.f32 %v79, %v583
    %v642 = vadd.f32 %v80, %v632
    %v643 = vld [vmem:[%s6] sm:$0x1]
    %v644 = vld [vmem:[%s7] sm:$0x1]
    %v645 = vld [vmem:[%s8] sm:$0xf]
    %v646 = vld [vmem:[%s8 + $0x4] sm:$0xf]
    %v647 = vld [vmem:[%s8 + $0x8] sm:$0xf]
    %v648 = vld [vmem:[%s8 + $0xc] sm:$0xf]
    %v649 = vld [vmem:[%s9] sm:$0x1]
    %v650 = vld [vmem:[%s10] sm:$0xf]
    %v651 = vld [vmem:[%s10 + $0x4] sm:$0xf]
    %v652 = vld [vmem:[%s10 + $0x8] sm:$0xf]
    %v653 = vld [vmem:[%s10 + $0xc] sm:$0xf]
    %v654 = vld [vmem:[%s10 + $0x10] sm:$0xf]
    %v655 = vld [vmem:[%s10 + $0x14] sm:$0xf]
    %v656 = vld [vmem:[%s10 + $0x18] sm:$0xf]
    %v657 = vld [vmem:[%s10 + $0x1c] sm:$0xf]
    %v658 = vld [vmem:[%s10 + $0x20] sm:$0xf]
    %v659 = vld [vmem:[%s10 + $0x24] sm:$0xf]
    %v660 = vld [vmem:[%s10 + $0x28] sm:$0xf]
    %v661 = vld [vmem:[%s10 + $0x2c] sm:$0xf]
    %v662 = vld [vmem:[%s10 + $0x30] sm:$0xf]
    %v663 = vld [vmem:[%s10 + $0x34] sm:$0xf]
    %v664 = vld [vmem:[%s10 + $0x38] sm:$0xf]
    %v665 = vld [vmem:[%s10 + $0x3c] sm:$0xf]
    %v666 = vld [vmem:[%s11] sm:$0x1]
    %v667 = vld [vmem:[%s12] sm:$0x1]
    %v668 = vld [vmem:[%s13] sm:$0x1]
    %v669 = vsel %vm105, %v639, 0.0
    %670 = vadd.xlane.f32.xlu0 %v669
    %v671 = vpop.xlane.xlu0 %670
    %v672 = vsel %vm105, %v640, 0.0
    %673 = vadd.xlane.f32.xlu0 %v672
    %v674 = vpop.xlane.xlu0 %673
    %v675 = vrcp.pop 32.0
    %v676 = vmul.f32 %v671, %v675
    %v677 = vmul.f32 %v674, %v675
    %v678 = vsub.f32 %v639, %v676
    %v679 = vsub.f32 %v640, %v677
    %v680 = vmul.f32 %v678, %v678
    %v681 = vmul.f32 %v679, %v679
    %v682 = vsel %vm105, %v680, 0.0
    %683 = vadd.xlane.f32.xlu0 %v682
    %v684 = vpop.xlane.xlu0 %683
    %v685 = vsel %vm105, %v681, 0.0
    %686 = vadd.xlane.f32.xlu0 %v685
    %v687 = vpop.xlane.xlu0 %686
    %v688 = vmul.f32 %v684, %v675
    %v689 = vmul.f32 %v687, %v675
    %v690 = vadd.f32 %v688, 1e-05
    %v691 = vadd.f32 %v689, 1e-05
    %v692 = vrsqrt.pop %v690
    %v693 = vrsqrt.pop %v691
    %v694 = vmul.f32 %v678, %v692
    %v695 = vmul.f32 %v679, %v693
    %v697 = vlaneseq
    %v698 = vshrl.u32 %v697, 7
    %v699 = vsub.s32 0, %v698
    %v700 = vrot.slane %v643, %v699
    %v702 = vmul.f32 %v694, %v700
    %v703 = vmul.f32 %v695, %v700
    %v705 = vlaneseq
    %v706 = vshrl.u32 %v705, 7
    %v707 = vsub.s32 0, %v706
    %v708 = vrot.slane %v644, %v707
    %v710 = vadd.f32 %v702, %v708
    %v711 = vadd.f32 %v703, %v708
    %v712 = vpack.c.bf16 %v711, %v710
    %v714 = vlaneseq
    %v715 = vshrl.u32 %v714, 7
    %v716 = vsub.s32 0, %v715
    %v717 = vrot.slane %v649, %v716
    %v723 = vunpack.c.l.b16 %v645
    %v724 = vunpack.c.l.b16 %v646
    %v725 = vunpack.c.l.b16 %v647
    %v726 = vunpack.c.l.b16 %v648
    %v727 = vpack.c.b16 %v724, %v723
    %v728 = vpack.c.b16 %v726, %v725
    %v732 = vsel %vm105, %v712, 0
    %734 = vmatprep.subr.bf16.mxu0 0
    %735 = vmatpush1.bf16.msra.mxu0 %v727
    %736 = vmatprep.subr.bf16.mxu0 0
    %737 = vmatpush1.bf16.msra.mxu0 %v728
    %738 = vmatprep.subr.bf16.mxu0 0
    %739 = vmatpush1.bf16.msra.mxu0 0
    %740 = vmatprep.subr.bf16.mxu0 0
    %741 = vmatpush1.bf16.msra.mxu0 0
    %742 = vmatprep.subr.bf16.mxu0 0
    %743 = vmatpush1.bf16.msra.mxu0 0
    %744 = vmatprep.subr.bf16.mxu0 0
    %745 = vmatpush1.bf16.msra.mxu0 0
    %746 = vmatprep.subr.bf16.mxu0 0
    %747 = vmatpush1.bf16.msra.mxu0 0
    %748 = vmatprep.subr.bf16.mxu0 0
    %749 = vmatpush1.bf16.msra.mxu0 0
    %750 = vmatprep.subr.bf16.mxu0 0
    %751 = vmatpush1.bf16.msra.mxu0 0
    %752 = vmatprep.subr.bf16.mxu0 0
    %753 = vmatpush1.bf16.msra.mxu0 0
    %754 = vmatprep.subr.bf16.mxu0 0
    %755 = vmatpush1.bf16.msra.mxu0 0
    %756 = vmatprep.subr.bf16.mxu0 0
    %757 = vmatpush1.bf16.msra.mxu0 0
    %758 = vmatprep.subr.bf16.mxu0 0
    %759 = vmatpush1.bf16.msra.mxu0 0
    %760 = vmatprep.subr.bf16.mxu0 0
    %761 = vmatpush1.bf16.msra.mxu0 0
    %762 = vmatprep.subr.bf16.mxu0 0
    %763 = vmatpush1.bf16.msra.mxu0 0
    %764 = vmatprep.subr.bf16.mxu0 0
    %765 = vmatpush1.bf16.msra.mxu0 0
    %766 = vmatprep.mubr.bf16.mxu0 0
    %767 = vmatmul.mubr.bf16.gmra.mrb[0].mxu0 %v732
    %v768 = vpop.f32.mrb[0].mxu0
    %v769 = vadd.f32 %v717, %v768
    %v770 = vpop.f32.mrb[0].mxu0
    %v771 = vpop.f32.mrb[0].mxu0
    %v772 = vadd.f32 %v717, %v771
    %v773 = vpop.f32.mrb[0].mxu0
    %774 = vdwg.mxu0
    %v775 = vmax.f32 %v769, 0.0
    %v776 = vmax.f32 %v772, 0.0
    %v777 = vpack.c.bf16 %v776, %v775
    %v779 = vlaneseq
    %v780 = vshrl.u32 %v779, 7
    %v781 = vsub.s32 0, %v780
    %v782 = vrot.slane %v666, %v781
    %v800 = vunpack.c.l.b16 %v650
    %v801 = vunpack.c.l.b16 %v651
    %v802 = vunpack.c.l.b16 %v652
    %v803 = vunpack.c.l.b16 %v653
    %v804 = vunpack.c.l.b16 %v654
    %v805 = vunpack.c.l.b16 %v655
    %v806 = vunpack.c.l.b16 %v656
    %v807 = vunpack.c.l.b16 %v657
    %v808 = vunpack.c.l.b16 %v658
    %v809 = vunpack.c.l.b16 %v659
    %v810 = vunpack.c.l.b16 %v660
    %v811 = vunpack.c.l.b16 %v661
    %v812 = vunpack.c.l.b16 %v662
    %v813 = vunpack.c.l.b16 %v663
    %v814 = vunpack.c.l.b16 %v664
    %v815 = vunpack.c.l.b16 %v665
    %v816 = vpack.c.b16 %v801, %v800
    %v817 = vpack.c.b16 %v803, %v802
    %v818 = vpack.c.b16 %v805, %v804
    %v819 = vpack.c.b16 %v807, %v806
    %v820 = vpack.c.b16 %v809, %v808
    %v821 = vpack.c.b16 %v811, %v810
    %v822 = vpack.c.b16 %v813, %v812
    %v823 = vpack.c.b16 %v815, %v814
    %832 = vmatprep.subr.bf16.mxu0 0
    %833 = vmatpush1.bf16.msra.mxu0 %v816
    %834 = vmatprep.subr.bf16.mxu0 0
    %835 = vmatpush1.bf16.msra.mxu0 %v817
    %836 = vmatprep.subr.bf16.mxu0 0
    %837 = vmatpush1.bf16.msra.mxu0 %v818
    %838 = vmatprep.subr.bf16.mxu0 0
    %839 = vmatpush1.bf16.msra.mxu0 %v819
    %840 = vmatprep.subr.bf16.mxu0 0
    %841 = vmatpush1.bf16.msra.mxu0 %v820
    %842 = vmatprep.subr.bf16.mxu0 0
    %843 = vmatpush1.bf16.msra.mxu0 %v821
    %844 = vmatprep.subr.bf16.mxu0 0
    %845 = vmatpush1.bf16.msra.mxu0 %v822
    %846 = vmatprep.subr.bf16.mxu0 0
    %847 = vmatpush1.bf16.msra.mxu0 %v823
    %848 = vmatprep.subr.bf16.mxu0 0
    %849 = vmatpush1.bf16.msra.mxu0 0
    %850 = vmatprep.subr.bf16.mxu0 0
    %851 = vmatpush1.bf16.msra.mxu0 0
    %852 = vmatprep.subr.bf16.mxu0 0
    %853 = vmatpush1.bf16.msra.mxu0 0
    %854 = vmatprep.subr.bf16.mxu0 0
    %855 = vmatpush1.bf16.msra.mxu0 0
    %856 = vmatprep.subr.bf16.mxu0 0
    %857 = vmatpush1.bf16.msra.mxu0 0
    %858 = vmatprep.subr.bf16.mxu0 0
    %859 = vmatpush1.bf16.msra.mxu0 0
    %860 = vmatprep.subr.bf16.mxu0 0
    %861 = vmatpush1.bf16.msra.mxu0 0
    %862 = vmatprep.subr.bf16.mxu0 0
    %863 = vmatpush1.bf16.msra.mxu0 0
    %864 = vmatprep.mubr.bf16.mxu0 0
    %865 = vmatmul.mubr.bf16.gmra.mrb[0].mxu0 %v777
    %v866 = vpop.f32.mrb[0].mxu0
    %v867 = vadd.f32 %v782, %v866
    %v868 = vpop.f32.mrb[0].mxu0
    %v869 = vpop.f32.mrb[0].mxu0
    %v870 = vadd.f32 %v782, %v869
    %v871 = vpop.f32.mrb[0].mxu0
    %872 = vdwg.mxu0
    %v873 = vadd.f32 %v639, %v867
    %v874 = vadd.f32 %v640, %v870
    %v875 = vsel %vm105, %v873, 0.0
    %876 = vadd.xlane.f32.xlu0 %v875
    %v877 = vpop.xlane.xlu0 %876
    %v878 = vsel %vm105, %v874, 0.0
    %879 = vadd.xlane.f32.xlu0 %v878
    %v880 = vpop.xlane.xlu0 %879
    %v881 = vmul.f32 %v877, %v675
    %v882 = vmul.f32 %v880, %v675
    %v883 = vsub.f32 %v873, %v881
    %v884 = vsub.f32 %v874, %v882
    %v885 = vmul.f32 %v883, %v883
    %v886 = vmul.f32 %v884, %v884
    %v887 = vsel %vm105, %v885, 0.0
    %888 = vadd.xlane.f32.xlu0 %v887
    %v889 = vpop.xlane.xlu0 %888
    %v890 = vsel %vm105, %v886, 0.0
    %891 = vadd.xlane.f32.xlu0 %v890
    %v892 = vpop.xlane.xlu0 %891
    %v893 = vmul.f32 %v889, %v675
    %v894 = vmul.f32 %v892, %v675
    %v895 = vadd.f32 %v893, 1e-05
    %v896 = vadd.f32 %v894, 1e-05
    %v897 = vrsqrt.pop %v895
    %v898 = vrsqrt.pop %v896
    %v899 = vmul.f32 %v883, %v897
    %v900 = vmul.f32 %v884, %v898
    %v902 = vlaneseq
    %v903 = vshrl.u32 %v902, 7
    %v904 = vsub.s32 0, %v903
    %v905 = vrot.slane %v667, %v904
    %v907 = vmul.f32 %v899, %v905
    %v908 = vmul.f32 %v900, %v905
    %v910 = vlaneseq
    %v911 = vshrl.u32 %v910, 7
    %v912 = vsub.s32 0, %v911
    %v913 = vrot.slane %v668, %v912
    %v915 = vadd.f32 %v907, %v913
    %v916 = vadd.f32 %v908, %v913
    %917 = vst.msk [vmem:[#allocation2] sm:$0xff] %vm105, %v915
    %918 = vst.msk [vmem:[#allocation2 + $0x8] sm:$0xff] %vm105, %v916
    %v919 = vld [vmem:[%s14] sm:$0x1]
    %v920 = vld [vmem:[%s15] sm:$0x1]
    %v921 = vld [vmem:[%s16] sm:$0xf]
    %v922 = vld [vmem:[%s16 + $0x4] sm:$0xf]
    %v923 = vld [vmem:[%s17] sm:$0x1]
    %v924 = vld [vmem:[%s18] sm:$0xf]
    %v925 = vld [vmem:[%s18 + $0x4] sm:$0xf]
    %v926 = vld [vmem:[%s18 + $0x8] sm:$0xf]
    %v927 = vld [vmem:[%s18 + $0xc] sm:$0xf]
    %v928 = vld [vmem:[%s18 + $0x10] sm:$0xf]
    %v929 = vld [vmem:[%s18 + $0x14] sm:$0xf]
    %v930 = vld [vmem:[%s18 + $0x18] sm:$0xf]
    %v931 = vld [vmem:[%s18 + $0x1c] sm:$0xf]
    %v932 = vld [vmem:[%s19] sm:$0x1]
    %v933 = vld [vmem:[%s20] sm:$0x1]
    %v934 = vld [vmem:[%s21] sm:$0x1]
    %v935 = vsel %vm166, %v641, 0.0
    %936 = vadd.xlane.f32.xlu0 %v935
    %v937 = vpop.xlane.xlu0 %936
    %v938 = vsel %vm166, %v642, 0.0
    %939 = vadd.xlane.f32.xlu0 %v938
    %v940 = vpop.xlane.xlu0 %939
    %v941 = vrcp.pop 16.0
    %v942 = vmul.f32 %v937, %v941
    %v943 = vmul.f32 %v940, %v941
    %v944 = vsub.f32 %v641, %v942
    %v945 = vsub.f32 %v642, %v943
    %v946 = vmul.f32 %v944, %v944
    %v947 = vmul.f32 %v945, %v945
    %v948 = vsel %vm166, %v946, 0.0
    %949 = vadd.xlane.f32.xlu0 %v948
    %v950 = vpop.xlane.xlu0 %949
    %v951 = vsel %vm166, %v947, 0.0
    %952 = vadd.xlane.f32.xlu0 %v951
    %v953 = vpop.xlane.xlu0 %952
    %v954 = vmul.f32 %v950, %v941
    %v955 = vmul.f32 %v953, %v941
    %v956 = vadd.f32 %v954, 1e-05
    %v957 = vadd.f32 %v955, 1e-05
    %v958 = vrsqrt.pop %v956
    %v959 = vrsqrt.pop %v957
    %v960 = vmul.f32 %v944, %v958
    %v961 = vmul.f32 %v945, %v959
    %v963 = vlaneseq
    %v964 = vshrl.u32 %v963, 7
    %v965 = vsub.s32 0, %v964
    %v966 = vrot.slane %v919, %v965
    %v968 = vmul.f32 %v960, %v966
    %v969 = vmul.f32 %v961, %v966
    %v971 = vlaneseq
    %v972 = vshrl.u32 %v971, 7
    %v973 = vsub.s32 0, %v972
    %v974 = vrot.slane %v920, %v973
    %v976 = vadd.f32 %v968, %v974
    %v977 = vadd.f32 %v969, %v974
    %v978 = vpack.c.bf16 %v977, %v976
    %v980 = vlaneseq
    %v981 = vshrl.u32 %v980, 7
    %v982 = vsub.s32 0, %v981
    %v983 = vrot.slane %v923, %v982
    %v987 = vunpack.c.l.b16 %v921
    %v988 = vunpack.c.l.b16 %v922
    %v989 = vpack.c.b16 %v988, %v987
    %v992 = vsel %vm166, %v978, 0
    %994 = vmatprep.subr.bf16.mxu0 0
    %995 = vmatpush1.bf16.msra.mxu0 %v989
    %996 = vmatprep.subr.bf16.mxu0 0
    %997 = vmatpush1.bf16.msra.mxu0 0
    %998 = vmatprep.subr.bf16.mxu0 0
    %999 = vmatpush1.bf16.msra.mxu0 0
    %1000 = vmatprep.subr.bf16.mxu0 0
    %1001 = vmatpush1.bf16.msra.mxu0 0
    %1002 = vmatprep.subr.bf16.mxu0 0
    %1003 = vmatpush1.bf16.msra.mxu0 0
    %1004 = vmatprep.subr.bf16.mxu0 0
    %1005 = vmatpush1.bf16.msra.mxu0 0
    %1006 = vmatprep.subr.bf16.mxu0 0
    %1007 = vmatpush1.bf16.msra.mxu0 0
    %1008 = vmatprep.subr.bf16.mxu0 0
    %1009 = vmatpush1.bf16.msra.mxu0 0
    %1010 = vmatprep.subr.bf16.mxu0 0
    %1011 = vmatpush1.bf16.msra.mxu0 0
    %1012 = vmatprep.subr.bf16.mxu0 0
    %1013 = vmatpush1.bf16.msra.mxu0 0
    %1014 = vmatprep.subr.bf16.mxu0 0
    %1015 = vmatpush1.bf16.msra.mxu0 0
    %1016 = vmatprep.subr.bf16.mxu0 0
    %1017 = vmatpush1.bf16.msra.mxu0 0
    %1018 = vmatprep.subr.bf16.mxu0 0
    %1019 = vmatpush1.bf16.msra.mxu0 0
    %1020 = vmatprep.subr.bf16.mxu0 0
    %1021 = vmatpush1.bf16.msra.mxu0 0
    %1022 = vmatprep.subr.bf16.mxu0 0
    %1023 = vmatpush1.bf16.msra.mxu0 0
    %1024 = vmatprep.subr.bf16.mxu0 0
    %1025 = vmatpush1.bf16.msra.mxu0 0
    %1026 = vmatprep.mubr.bf16.mxu0 0
    %1027 = vmatmul.mubr.bf16.gmra.mrb[0].mxu0 %v992
    %v1028 = vpop.f32.mrb[0].mxu0
    %v1029 = vadd.f32 %v983, %v1028
    %v1030 = vpop.f32.mrb[0].mxu0
    %v1031 = vpop.f32.mrb[0].mxu0
    %v1032 = vadd.f32 %v983, %v1031
    %v1033 = vpop.f32.mrb[0].mxu0
    %1034 = vdwg.mxu0
    %v1035 = vmax.f32 %v1029, 0.0
    %v1036 = vmax.f32 %v1032, 0.0
    %v1037 = vpack.c.bf16 %v1036, %v1035
    %v1039 = vlaneseq
    %v1040 = vshrl.u32 %v1039, 7
    %v1041 = vsub.s32 0, %v1040
    %v1042 = vrot.slane %v932, %v1041
    %v1052 = vunpack.c.l.b16 %v924
    %v1053 = vunpack.c.l.b16 %v925
    %v1054 = vunpack.c.l.b16 %v926
    %v1055 = vunpack.c.l.b16 %v927
    %v1056 = vunpack.c.l.b16 %v928
    %v1057 = vunpack.c.l.b16 %v929
    %v1058 = vunpack.c.l.b16 %v930
    %v1059 = vunpack.c.l.b16 %v931
    %v1060 = vpack.c.b16 %v1053, %v1052
    %v1061 = vpack.c.b16 %v1055, %v1054
    %v1062 = vpack.c.b16 %v1057, %v1056
    %v1063 = vpack.c.b16 %v1059, %v1058
    %vm1068 = vcmask 523264
    %v1070 = vsel %vm1068, %v1037, 0
    %1072 = vmatprep.subr.bf16.mxu0 0
    %1073 = vmatpush1.bf16.msra.mxu0 %v1060
    %1074 = vmatprep.subr.bf16.mxu0 0
    %1075 = vmatpush1.bf16.msra.mxu0 %v1061
    %1076 = vmatprep.subr.bf16.mxu0 0
    %1077 = vmatpush1.bf16.msra.mxu0 %v1062
    %1078 = vmatprep.subr.bf16.mxu0 0
    %1079 = vmatpush1.bf16.msra.mxu0 %v1063
    %1080 = vmatprep.subr.bf16.mxu0 0
    %1081 = vmatpush1.bf16.msra.mxu0 0
    %1082 = vmatprep.subr.bf16.mxu0 0
    %1083 = vmatpush1.bf16.msra.mxu0 0
    %1084 = vmatprep.subr.bf16.mxu0 0
    %1085 = vmatpush1.bf16.msra.mxu0 0
    %1086 = vmatprep.subr.bf16.mxu0 0
    %1087 = vmatpush1.bf16.msra.mxu0 0
    %1088 = vmatprep.subr.bf16.mxu0 0
    %1089 = vmatpush1.bf16.msra.mxu0 0
    %1090 = vmatprep.subr.bf16.mxu0 0
    %1091 = vmatpush1.bf16.msra.mxu0 0
    %1092 = vmatprep.subr.bf16.mxu0 0
    %1093 = vmatpush1.bf16.msra.mxu0 0
    %1094 = vmatprep.subr.bf16.mxu0 0
    %1095 = vmatpush1.bf16.msra.mxu0 0
    %1096 = vmatprep.subr.bf16.mxu0 0
    %1097 = vmatpush1.bf16.msra.mxu0 0
    %1098 = vmatprep.subr.bf16.mxu0 0
    %1099 = vmatpush1.bf16.msra.mxu0 0
    %1100 = vmatprep.subr.bf16.mxu0 0
    %1101 = vmatpush1.bf16.msra.mxu0 0
    %1102 = vmatprep.subr.bf16.mxu0 0
    %1103 = vmatpush1.bf16.msra.mxu0 0
    %1104 = vmatprep.mubr.bf16.mxu0 0
    %1105 = vmatmul.mubr.bf16.gmra.mrb[0].mxu0 %v1070
    %v1106 = vpop.f32.mrb[0].mxu0
    %v1107 = vadd.f32 %v1042, %v1106
    %v1108 = vpop.f32.mrb[0].mxu0
    %v1109 = vpop.f32.mrb[0].mxu0
    %v1110 = vadd.f32 %v1042, %v1109
    %v1111 = vpop.f32.mrb[0].mxu0
    %1112 = vdwg.mxu0
    %v1113 = vadd.f32 %v641, %v1107
    %v1114 = vadd.f32 %v642, %v1110
    %v1115 = vsel %vm166, %v1113, 0.0
    %1116 = vadd.xlane.f32.xlu0 %v1115
    %v1117 = vpop.xlane.xlu0 %1116
    %v1118 = vsel %vm166, %v1114, 0.0
    %1119 = vadd.xlane.f32.xlu0 %v1118
    %v1120 = vpop.xlane.xlu0 %1119
    %v1121 = vmul.f32 %v1117, %v941
    %v1122 = vmul.f32 %v1120, %v941
    %v1123 = vsub.f32 %v1113, %v1121
    %v1124 = vsub.f32 %v1114, %v1122
    %v1125 = vmul.f32 %v1123, %v1123
    %v1126 = vmul.f32 %v1124, %v1124
    %v1127 = vsel %vm166, %v1125, 0.0
    %1128 = vadd.xlane.f32.xlu0 %v1127
    %v1129 = vpop.xlane.xlu0 %1128
    %v1130 = vsel %vm166, %v1126, 0.0
    %1131 = vadd.xlane.f32.xlu0 %v1130
    %v1132 = vpop.xlane.xlu0 %1131
    %v1133 = vmul.f32 %v1129, %v941
    %v1134 = vmul.f32 %v1132, %v941
    %v1135 = vadd.f32 %v1133, 1e-05
    %v1136 = vadd.f32 %v1134, 1e-05
    %v1137 = vrsqrt.pop %v1135
    %v1138 = vrsqrt.pop %v1136
    %v1139 = vmul.f32 %v1123, %v1137
    %v1140 = vmul.f32 %v1124, %v1138
    %v1142 = vlaneseq
    %v1143 = vshrl.u32 %v1142, 7
    %v1144 = vsub.s32 0, %v1143
    %v1145 = vrot.slane %v933, %v1144
    %v1147 = vmul.f32 %v1139, %v1145
    %v1148 = vmul.f32 %v1140, %v1145
    %v1150 = vlaneseq
    %v1151 = vshrl.u32 %v1150, 7
    %v1152 = vsub.s32 0, %v1151
    %v1153 = vrot.slane %v934, %v1152
    %v1155 = vadd.f32 %v1147, %v1153
    %v1156 = vadd.f32 %v1148, %v1153
    %1157 = vst.msk [vmem:[#allocation4] sm:$0xff] %vm166, %v1155
    %1158 = vst.msk [vmem:[#allocation4 + $0x8] sm:$0xff] %vm166, %v1156
    // Predicated region
    $region90: #{tv_encoder_layer.1} parent=1 // pred_check
      _
    $region91: #{tv_encoder_layer.1} parent=1 // pred_check_branch
      %1160 = sbr.rel (0) target = $region93
    $region92: #{tv_encoder_layer.1} parent=1 // pred_region
      %s1162 = ssub.s32 256, 256
      %1163 = vsyncadd [#allocation3], %s1162
      %s1164 = sshll.u32 [#allocation2], 4
      %s1165 = int_to_ptr.vmem [resolvable:$true] %s1164
      %1170 = dma.vmem_to_hbm [thread:$0]  %s1165, 256, %s22, [#allocation3], 128, 128, 8
    $region93: #{tv_encoder_layer.1} parent=1 // pred_fallthru
      _
    // Predicated region
    $region94: #{tv_encoder_layer.1} parent=1 // pred_check
      _
    $region95: #{tv_encoder_layer.1} parent=1 // pred_check_branch
      %1172 = sbr.rel (0) target = $region97
    $region96: #{tv_encoder_layer.1} parent=1 // pred_region
      %s1174 = ssub.s32 256, 256
      %1175 = vsyncadd [#allocation5], %s1174
      %s1176 = sshll.u32 [#allocation4], 4
      %s1177 = int_to_ptr.vmem [resolvable:$true] %s1176
      %1182 = dma.vmem_to_hbm [thread:$0]  %s1177, 256, %s23, [#allocation5], 128, 128, 8
    $region97: #{tv_encoder_layer.1} parent=1 // pred_fallthru
      _
    // Predicated region
    $region98: #{tv_encoder_layer.1} parent=1 // pred_check
      _
    $region99: #{tv_encoder_layer.1} parent=1 // pred_check_branch
      %1184 = sbr.rel (0) target = $region101
    $region100: #{tv_encoder_layer.1} parent=1 // pred_region
      %s1186 = ssub.s32 256, 256
      %1187 = vsyncadd [#allocation5], %s1186
      %s1188 = sshll.u32 [#allocation6], 4
      %s1189 = int_to_ptr.vmem [resolvable:$true] %s1188
      %1194 = dma.vmem_to_hbm [thread:$0]  %s1189, 256, %s24, [#allocation5], 128, 128, 8
    $region101: #{tv_encoder_layer.1} parent=1 // pred_fallthru
      _
    // Predicated region
    $region102: #{tv_encoder_layer.1} parent=1 // pred_check
      _
    $region103: #{tv_encoder_layer.1} parent=1 // pred_check_branch
      %1196 = sbr.rel (0) target = $region105
    $region104: #{tv_encoder_layer.1} parent=1 // pred_region
      %1197 = dma.done [#allocation3], 256
    $region105: #{tv_encoder_layer.1} parent=1 // pred_fallthru
      _
    // Predicated region
    $region106: #{tv_encoder_layer.1} parent=1 // pred_check
      _
    $region107: #{tv_encoder_layer.1} parent=1 // pred_check_branch
      %1199 = sbr.rel (0) target = $region109
    $region108: #{tv_encoder_layer.1} parent=1 // pred_region
      %1200 = dma.done [#allocation5], 256
    $region109: #{tv_encoder_layer.1} parent=1 // pred_fallthru
      _
    // Predicated region
    $region110: #{tv_encoder_layer.1} parent=1 // pred_check
      _
    $region111: #{tv_encoder_layer.1} parent=1 // pred_check_branch
      %1202 = sbr.rel (0) target = $region113
    $region112: #{tv_encoder_layer.1} parent=1 // pred_region
      %1203 = dma.done [#allocation5], 256
    $region113: #{tv_encoder_layer.1} parent=1 // pred_fallthru
      _
    %1204 = vsyncpa [#allocation3], 1
    %1205 = vsyncpa [#allocation5], 1

</llo_original>
